<compile_context>
chip_gen: v7x
topology: tpu7x:2x2x1
jax: 0.10.0
libtpu: 0.0.40
codegen_flags: <defaults>
</compile_context>

<pallas_src>
import functools

import numpy as np
import jax
import jax.numpy as jnp
from jax import lax
from jax.experimental import pallas as pl
from jax.experimental.pallas import tpu as pltpu

TM = 256     # rows of A per grid step (output row tile)
TK = 256     # reduction tile (columns of A / rows of H)
LANE = 128   # padded feature / class width (lane-dense)


# --------------------------------------------------------------------------
# Kernels
# --------------------------------------------------------------------------

def agg_relu_next_kernel(cols_ref, cnts_ref, a_ref, h_ref, d_ref, b_ref, wn_ref,
                         o_ref, acc_ref):
    """One GCN layer fused with the NEXT layer's feature transform.

      acc = sum_k (A+I)[i, cols[i,k]] @ Htilde[cols[i,k]]   (bf16 MXU, f32 acc)
      z   = relu(D^-1/2_row * acc + b)                      (= this layer's output)
      o   = (D^-1/2_row * z) @ W_next                       (= next layer's Htilde)
    """
    i = pl.program_id(0)
    k = pl.program_id(1)

    @pl.when(k == 0)
    def _():
        acc_ref[...] = jnp.zeros_like(acc_ref)

    # Block-sparse skip: only the first cnts[i] entries of cols[i, :] are real;
    # padded entries repeat the last block (no re-DMA) and must not accumulate.
    @pl.when(k < cnts_ref[i])
    def _():
        j = cols_ref[i, k]
        h_blk = h_ref[pl.ds(pl.multiple_of(j * TK, TK), TK), :]
        acc_ref[...] += jnp.dot(a_ref[...], h_blk,
                                preferred_element_type=jnp.float32)

    @pl.when(k == pl.num_programs(1) - 1)
    def _():
        d = d_ref[...]                                      # (TM, 1) f32 D^-1/2
        z = jnp.maximum(d * acc_ref[...] + b_ref[...], 0.0)
        o_ref[...] = jnp.dot((d * z).astype(wn_ref.dtype), wn_ref[...],
                             preferred_element_type=jnp.float32
                             ).astype(o_ref.dtype)


def agg_logsoftmax_kernel(n_classes, cols_ref, cnts_ref, a_ref, h_ref, d_ref,
                          b_ref, o_ref, acc_ref):
    """Final GCN layer: log_softmax(D^-1/2 * ((A+I) @ Htilde) + b), masking the
    zero-padded class columns. Math in f32, writeback bf16."""
    i = pl.program_id(0)
    k = pl.program_id(1)

    @pl.when(k == 0)
    def _():
        acc_ref[...] = jnp.zeros_like(acc_ref)

    @pl.when(k < cnts_ref[i])
    def _():
        j = cols_ref[i, k]
        h_blk = h_ref[pl.ds(pl.multiple_of(j * TK, TK), TK), :]
        acc_ref[...] += jnp.dot(a_ref[...], h_blk,
                                preferred_element_type=jnp.float32)

    @pl.when(k == pl.num_programs(1) - 1)
    def _():
        logits = d_ref[...] * acc_ref[...] + b_ref[...]
        col = lax.broadcasted_iota(jnp.int32, logits.shape, 1)
        valid = col < n_classes
        masked = jnp.where(valid, logits, jnp.float32(-1e30))
        m = jnp.max(masked, axis=1, keepdims=True)
        z = masked - m
        e = jnp.where(valid, jnp.exp(z), 0.0)
        lse = jnp.log(jnp.sum(e, axis=1, keepdims=True))
        o_ref[...] = jnp.where(valid, z - lse, 0.0).astype(o_ref.dtype)


# --------------------------------------------------------------------------
# pallas_call wrappers
# --------------------------------------------------------------------------

_COMPILER_PARAMS = pltpu.CompilerParams(
    dimension_semantics=("parallel", "arbitrary"),
    # v7x has only 64 MiB physical VMEM; keep the budget well under it while
    # still allowing resident-H + large-tile configs on bigger graphs.
    vmem_limit_bytes=48 * 1024 * 1024)


def gcn_agg_relu_next(a_blocks, h, dinv, b, w_next, cols, cnts, nnz_blocks):
    gm, gk, tm, tk = a_blocks.shape
    n_pad = gm * tm
    grid = (gm, cols.shape[1])
    cost = pl.CostEstimate(
        flops=2 * nnz_blocks * tm * tk * LANE + 2 * n_pad * LANE * LANE,
        transcendentals=0,
        bytes_accessed=(2 * nnz_blocks * tm * tk          # A stream (bf16)
                        + 2 * n_pad * LANE                # resident H (bf16)
                        + 4 * n_pad                       # dinv (f32)
                        + 4 * LANE + 2 * LANE * LANE      # bias + W_next
                        + 2 * n_pad * LANE))              # output (bf16)
    return pl.pallas_call(
        agg_relu_next_kernel,
        out_shape=jax.ShapeDtypeStruct((n_pad, LANE), jnp.bfloat16),
        grid_spec=pltpu.PrefetchScalarGridSpec(
            num_scalar_prefetch=2,
            grid=grid,
            in_specs=[
                # block-contiguous packed A: one contiguous (TM, TK) read/block
                pl.BlockSpec((pl.Squeezed(), pl.Squeezed(), TM, TK),
                             lambda i, k, c, n: (i, c[i, k], 0, 0)),
                # H fully VMEM-resident across the whole grid
                pl.BlockSpec((n_pad, LANE), lambda i, k, c, n: (0, 0)),
                pl.BlockSpec((TM, 1), lambda i, k, c, n: (i, 0)),       # D^-1/2
                pl.BlockSpec((1, LANE), lambda i, k, c, n: (0, 0)),     # bias
                pl.BlockSpec((LANE, LANE), lambda i, k, c, n: (0, 0)),  # W_next
            ],
            out_specs=pl.BlockSpec((TM, LANE), lambda i, k, c, n: (i, 0)),
            scratch_shapes=[pltpu.VMEM((TM, LANE), jnp.float32)]),
        compiler_params=_COMPILER_PARAMS,
        cost_estimate=cost,
    )(cols, cnts, a_blocks, h, dinv, b, w_next)


def gcn_agg_logsoftmax(a_blocks, h, dinv, b, cols, cnts, nnz_blocks, n_classes):
    gm, gk, tm, tk = a_blocks.shape
    n_pad = gm * tm
    grid = (gm, cols.shape[1])
    cost = pl.CostEstimate(
        flops=2 * nnz_blocks * tm * tk * LANE + 5 * n_pad * LANE,
        transcendentals=n_pad * LANE,
        bytes_accessed=(2 * nnz_blocks * tm * tk + 2 * n_pad * LANE
                        + 4 * n_pad + 4 * LANE + 2 * n_pad * LANE))
    kernel = functools.partial(agg_logsoftmax_kernel, n_classes)
    return pl.pallas_call(
        kernel,
        out_shape=jax.ShapeDtypeStruct((n_pad, LANE), jnp.bfloat16),
        grid_spec=pltpu.PrefetchScalarGridSpec(
            num_scalar_prefetch=2,
            grid=grid,
            in_specs=[
                pl.BlockSpec((pl.Squeezed(), pl.Squeezed(), TM, TK),
                             lambda i, k, c, n: (i, c[i, k], 0, 0)),
                pl.BlockSpec((n_pad, LANE), lambda i, k, c, n: (0, 0)),
                pl.BlockSpec((TM, 1), lambda i, k, c, n: (i, 0)),
                pl.BlockSpec((1, LANE), lambda i, k, c, n: (0, 0)),
            ],
            out_specs=pl.BlockSpec((TM, LANE), lambda i, k, c, n: (i, 0)),
            scratch_shapes=[pltpu.VMEM((TM, LANE), jnp.float32)]),
        compiler_params=_COMPILER_PARAMS,
        cost_estimate=cost,
    )(cols, cnts, a_blocks, h, dinv, b)


# --------------------------------------------------------------------------
# Host-side graph preprocessing (pure numpy, derived from edge_index)
# --------------------------------------------------------------------------

def prepare_graph(edge_index, num_nodes):
    """Build the packed 0/1 (A+I) blocks, block-sparsity metadata and D^-1/2
    entirely on host from the (2, E) edge_index (no device->host sync)."""
    edge_index = np.asarray(edge_index)
    blk = int(np.lcm(TM, TK))
    n_pad = int(-(-num_nodes // blk) * blk)

    a = np.zeros((n_pad, n_pad), np.float32)
    a[edge_index[1], edge_index[0]] = 1.0          # dst <- src (both dirs present)
    diag = np.arange(num_nodes)
    a[diag, diag] = 1.0                            # self loops (as in GCNConv)
    deg = a.sum(axis=1)
    dinv = np.where(deg > 0.0, 1.0 / np.sqrt(np.maximum(deg, 1e-12)),
                    0.0).astype(np.float32)

    gm, gk = n_pad // TM, n_pad // TK
    # block-contiguous packed layout: one A block = one contiguous DMA read
    blocks = np.ascontiguousarray(
        a.reshape(gm, TM, gk, TK).transpose(0, 2, 1, 3))   # (gm, gk, TM, TK)

    nz = blocks.reshape(gm, gk, -1).sum(axis=2) > 0.0
    max_nnz = max(1, int(nz.sum(axis=1).max()))
    cols = np.zeros((gm, max_nnz), np.int32)
    cnts = np.zeros((gm,), np.int32)
    for i in range(gm):
        nzi = np.nonzero(nz[i])[0]
        cnts[i] = nzi.size
        if nzi.size:
            cols[i, :nzi.size] = nzi
            cols[i, nzi.size:] = nzi[-1]           # repeat last block -> DMA dedupe

    # Dense normalized adjacency for the pure-JAX reference only.
    a_hat_dense = (dinv[:, None] * a * dinv[None, :])[:num_nodes, :num_nodes]

    return {
        "num_nodes": num_nodes,
        "n_pad": n_pad,
        "a_blocks": jnp.asarray(blocks, jnp.bfloat16),   # exact 0/1 in bf16
        "cols": jnp.asarray(cols),
        "cnts": jnp.asarray(cnts),
        "dinv": jnp.asarray(dinv).reshape(n_pad, 1),     # f32 D^-1/2
        "nnz_blocks": int(nz.sum()),
        "a_hat_dense": jnp.asarray(a_hat_dense, jnp.float32),
    }


# --------------------------------------------------------------------------
# Parameters
# --------------------------------------------------------------------------

def glorot(key, shape):
    fan_in, fan_out = shape
    limit = jnp.sqrt(6.0 / (fan_in + fan_out))
    return jax.random.uniform(key, shape, jnp.float32, -limit, limit)


def init_params(key, inputs, outputs):
    k1, k2, k3 = jax.random.split(key, 3)
    return {
        "w1": glorot(k1, (inputs, 128)), "b1": jnp.zeros((1, 128), jnp.float32),
        "w2": glorot(k2, (128, 64)),     "b2": jnp.zeros((1, 64), jnp.float32),
        "w3": glorot(k3, (64, outputs)), "b3": jnp.zeros((1, outputs), jnp.float32),
    }


def pad_params(params):
    """Zero-pad hidden 64 and the class dim to LANE=128 (semantics-preserving)."""
    out_dim = params["w3"].shape[1]
    w2p = jnp.zeros((128, LANE), jnp.float32).at[:, :64].set(params["w2"])
    b2p = jnp.zeros((1, LANE), jnp.float32).at[:, :64].set(params["b2"])
    w3p = jnp.zeros((LANE, LANE), jnp.float32).at[:64, :out_dim].set(params["w3"])
    b3p = jnp.zeros((1, LANE), jnp.float32).at[:, :out_dim].set(params["b3"])
    return {"b1": params["b1"], "w2p": w2p, "b2p": b2p, "w3p": w3p, "b3p": b3p}


# --------------------------------------------------------------------------
# Forward pass + reference
# --------------------------------------------------------------------------

def gcn_forward(x, graph, params):
    """Full 3-layer GCN forward. Returns [N, outputs] log-probabilities."""
    n = graph["num_nodes"]
    n_pad = graph["n_pad"]
    out_dim = params["w3"].shape[1]          # assumed <= LANE
    pp = pad_params(params)
    dinv = graph["dinv"]

    x_pad = jnp.zeros((n_pad, x.shape[1]), jnp.float32).at[:n, :].set(x)
    # Hoisted small-K feature transform as a plain XLA dot (a dedicated
    # pallas_call with K=inputs would underfill the MXU and cost more than it
    # saves). Column-side D^-1/2 is folded into H in f32 before the bf16 cast.
    h1 = ((x_pad @ params["w1"]) * dinv).astype(jnp.bfloat16)

    a = graph["a_blocks"]
    cols, cnts, nnz = graph["cols"], graph["cnts"], graph["nnz_blocks"]

    # layer 1 (+ layer-2 transform): D^-1/2 relu(A_hat @ XW1 + b1) @ W2
    h2 = gcn_agg_relu_next(a, h1, dinv, pp["b1"],
                           pp["w2p"].astype(jnp.bfloat16), cols, cnts, nnz)
    # layer 2 (+ layer-3 transform): D^-1/2 relu(A_hat @ HW2 + b2) @ W3
    h3 = gcn_agg_relu_next(a, h2, dinv, pp["b2p"],
                           pp["w3p"].astype(jnp.bfloat16), cols, cnts, nnz)
    # layer 3 + masked log_softmax over the real classes
    out = gcn_agg_logsoftmax(a, h3, dinv, pp["b3p"], cols, cnts, nnz, out_dim)
    return out[:n, :out_dim]


def gcn_reference(a_hat, x, params):
    """Pure-JAX f32 reference (GCNConv: A_hat @ (X @ W) + b)."""
    h = jnp.maximum(a_hat @ (x @ params["w1"]) + params["b1"], 0.0)
    h = jnp.maximum(a_hat @ (h @ params["w2"]) + params["b2"], 0.0)
    h = a_hat @ (h @ params["w3"]) + params["b3"]
    m = jnp.max(h, axis=1, keepdims=True)
    z = h - m
    return z - jnp.log(jnp.sum(jnp.exp(z), axis=1, keepdims=True))


if __name__ == "__main__":
    key = jax.random.PRNGKey(0)
    k_x, k_p = jax.random.split(key)

    num_nodes = 600   # pads to 768 -> 3x3 A-block grid with 2 zero blocks
    inputs = 16
    outputs = 4

    x = jax.random.normal(k_x, (num_nodes, inputs), jnp.float32)

    # Deterministic undirected path graph: edges i <-> i+1 (numpy, host-side).
    src = np.arange(num_nodes - 1, dtype=np.int32)
    dst = src + 1
    edge_index = np.stack(
        [np.concatenate([src, dst]), np.concatenate([dst, src])], axis=0)

    graph = prepare_graph(edge_index, num_nodes)
    params = init_params(k_p, inputs, outputs)

    out = gcn_forward(x, graph, params)
    jax.block_until_ready(out)

    assert out.shape == (num_nodes, outputs)

    # log_softmax rows must exponentiate-sum to ~1 (bf16 writeback -> 1e-2).
    out_f32 = out.astype(jnp.float32)
    row_sums = jnp.sum(jnp.exp(out_f32), axis=1)
    assert bool(jnp.all(jnp.abs(row_sums - 1.0) < 1e-2))

    # Compare against f32 reference (bf16 features/weights -> loose tolerance).
    ref = gcn_reference(graph["a_hat_dense"], x, params)
    err = float(jnp.max(jnp.abs(out_f32 - ref)))
    assert err < 7.5e-2, f"max abs error vs f32 reference = {err}"

    print("KERNEL_OK")
</pallas_src>

<mosaic_0001>
module attributes {stable_mosaic.version = 11 : i64} {
  func.func @agg_relu_next_kernel(%arg0: i32, %arg1: i32, %arg2: memref<3x3xi32, #tpu.memory_space<smem>>, %arg3: memref<3xi32, #tpu.memory_space<smem>>, %arg4: memref<1x1x256x256xbf16, #tpu.memory_space<vmem>>, %arg5: memref<768x128xbf16, #tpu.memory_space<vmem>>, %arg6: memref<256x1xf32, #tpu.memory_space<vmem>>, %arg7: memref<1x128xf32, #tpu.memory_space<vmem>>, %arg8: memref<128x128xbf16, #tpu.memory_space<vmem>>, %arg9: memref<256x128xbf16, #tpu.memory_space<vmem>>, %arg10: memref<256x128xf32, #tpu.memory_space<vmem>>) attributes {dimension_semantics = [#tpu.dimension_semantics<parallel>, #tpu.dimension_semantics<arbitrary>], iteration_bounds = array<i64: 3, 3>, scalar_prefetch = 2 : i64, scratch_operands = 1 : i64, tpu.core_type = #tpu.core_type<tc>, window_params = [{transform_indices = @transform_0, window_bounds = array<i64: 1, 1, 256, 256>}, {pipeline_mode = #tpu.pipeline_mode<synchronous>, transform_indices = @transform_1, window_bounds = array<i64: 768, 128>}, {transform_indices = @transform_2, window_bounds = array<i64: 256, 1>}, {pipeline_mode = #tpu.pipeline_mode<synchronous>, transform_indices = @transform_3, window_bounds = array<i64: 1, 128>}, {pipeline_mode = #tpu.pipeline_mode<synchronous>, transform_indices = @transform_4, window_bounds = array<i64: 128, 128>}, {transform_indices = @transform_5, window_bounds = array<i64: 256, 128>}]} {
    %c0_i32 = arith.constant 0 : i32
    %0 = arith.cmpi eq, %arg1, %c0_i32 : i32
    %1 = arith.extui %0 : i1 to i32
    %c0_i32_0 = arith.constant 0 : i32
    %2 = arith.cmpi ne, %1, %c0_i32_0 : i32
    scf.if %2 {
      %cst = arith.constant 0.000000e+00 : f32
      %11 = vector.broadcast %cst : f32 to vector<256x128xf32>
      %c0 = arith.constant 0 : index
      %c0_3 = arith.constant 0 : index
      %12 = vector.load %arg10[%c0, %c0_3] : memref<256x128xf32, #tpu.memory_space<vmem>>, vector<256x128xf32>
      tpu.vector_store %arg10[%c0, %c0_3], %11 {strides = array<i32>} : memref<256x128xf32, #tpu.memory_space<vmem>>, vector<256x128xf32>,
    } else {
    }
    %3 = arith.index_cast %arg0 : i32 to index
    %4 = memref.load %arg3[%3] : memref<3xi32, #tpu.memory_space<smem>>
    %5 = arith.cmpi slt, %arg1, %4 : i32
    %6 = arith.extui %5 : i1 to i32
    %c0_i32_1 = arith.constant 0 : i32
    %7 = arith.cmpi ne, %6, %c0_i32_1 : i32
    scf.if %7 {
      %11 = arith.index_cast %arg0 : i32 to index
      %12 = arith.index_cast %arg1 : i32 to index
      %13 = memref.load %arg2[%11, %12] : memref<3x3xi32, #tpu.memory_space<smem>>
      %c256_i32 = arith.constant 256 : i32
      %14 = arith.muli %13, %c256_i32 : i32
      %15 = tpu.assume_multiple %14, 256 : i32
      %16 = arith.index_cast %15 : i32 to index
      %c0 = arith.constant 0 : index
      %17 = vector.load %arg5[%16, %c0] : memref<768x128xbf16, #tpu.memory_space<vmem>>, vector<256x128xbf16>
      %c0_3 = arith.constant 0 : index
      %c0_4 = arith.constant 0 : index
      %18 = vector.load %arg10[%c0_3, %c0_4] : memref<256x128xf32, #tpu.memory_space<vmem>>, vector<256x128xf32>
      %c0_5 = arith.constant 0 : index
      %c0_6 = arith.constant 0 : index
      %c0_7 = arith.constant 0 : index
      %c0_8 = arith.constant 0 : index
      %19 = vector.load %arg4[%c0_5, %c0_6, %c0_7, %c0_8] : memref<1x1x256x256xbf16, #tpu.memory_space<vmem>>, vector<1x1x256x256xbf16>
      %20 = vector.shape_cast %19 : vector<1x1x256x256xbf16> to vector<256x256xbf16>
      %cst = arith.constant dense<0.000000e+00> : vector<256x128xf32>
      %21 = tpu.matmul %20, %17, %cst {dimension_numbers = #tpu.dot_dimension_numbers<[1], [0], [0], [1], [0, 0, 1, 1], [], []>} : vector<256x256xbf16>, vector<256x128xbf16>, vector<256x128xf32> -> vector<256x128xf32>
      %22 = arith.addf %18, %21 : vector<256x128xf32>
      %c0_9 = arith.constant 0 : index
      %c0_10 = arith.constant 0 : index
      %23 = vector.load %arg10[%c0_9, %c0_10] : memref<256x128xf32, #tpu.memory_space<vmem>>, vector<256x128xf32>
      tpu.vector_store %arg10[%c0_9, %c0_10], %22 {strides = array<i32>} : memref<256x128xf32, #tpu.memory_space<vmem>>, vector<256x128xf32>,
    } else {
    }
    %c2_i32 = arith.constant 2 : i32
    %8 = arith.cmpi eq, %arg1, %c2_i32 : i32
    %9 = arith.extui %8 : i1 to i32
    %c0_i32_2 = arith.constant 0 : i32
    %10 = arith.cmpi ne, %9, %c0_i32_2 : i32
    scf.if %10 {
      %c0 = arith.constant 0 : index
      %c0_3 = arith.constant 0 : index
      %11 = vector.load %arg6[%c0, %c0_3] : memref<256x1xf32, #tpu.memory_space<vmem>>, vector<256x1xf32>
      %c0_4 = arith.constant 0 : index
      %c0_5 = arith.constant 0 : index
      %12 = vector.load %arg10[%c0_4, %c0_5] : memref<256x128xf32, #tpu.memory_space<vmem>>, vector<256x128xf32>
      %13 = vector.broadcast %11 : vector<256x1xf32> to vector<256x128xf32>
      %14 = arith.mulf %13, %12 : vector<256x128xf32>
      %c0_6 = arith.constant 0 : index
      %c0_7 = arith.constant 0 : index
      %15 = vector.load %arg7[%c0_6, %c0_7] : memref<1x128xf32, #tpu.memory_space<vmem>>, vector<1x128xf32>
      %16 = vector.broadcast %15 : vector<1x128xf32> to vector<256x128xf32>
      %17 = arith.addf %14, %16 : vector<256x128xf32>
      %cst = arith.constant 0.000000e+00 : f32
      %18 = vector.broadcast %cst : f32 to vector<256x128xf32>
      %19 = arith.maximumf %17, %18 : vector<256x128xf32>
      %20 = vector.broadcast %11 : vector<256x1xf32> to vector<256x128xf32>
      %21 = arith.mulf %20, %19 : vector<256x128xf32>
      %22 = arith.truncf %21 : vector<256x128xf32> to vector<256x128xbf16>
      %c0_8 = arith.constant 0 : index
      %c0_9 = arith.constant 0 : index
      %23 = vector.load %arg8[%c0_8, %c0_9] : memref<128x128xbf16, #tpu.memory_space<vmem>>, vector<128x128xbf16>
      %cst_10 = arith.constant dense<0.000000e+00> : vector<256x128xf32>
      %24 = tpu.matmul %22, %23, %cst_10 {dimension_numbers = #tpu.dot_dimension_numbers<[1], [0], [0], [1], [0, 0, 1, 1], [], []>} : vector<256x128xbf16>, vector<128x128xbf16>, vector<256x128xf32> -> vector<256x128xf32>
      %25 = arith.truncf %24 : vector<256x128xf32> to vector<256x128xbf16>
      %c0_11 = arith.constant 0 : index
      %c0_12 = arith.constant 0 : index
      %26 = vector.load %arg9[%c0_11, %c0_12] : memref<256x128xbf16, #tpu.memory_space<vmem>>, vector<256x128xbf16>
      tpu.vector_store %arg9[%c0_11, %c0_12], %25 {strides = array<i32>} : memref<256x128xbf16, #tpu.memory_space<vmem>>, vector<256x128xbf16>,
    } else {
    }
    return
  }
  func.func @transform_0(%arg0: i32, %arg1: i32, %arg2: memref<3x3xi32, #tpu.memory_space<smem>>, %arg3: memref<3xi32, #tpu.memory_space<smem>>) -> (i32, i32, i32, i32) {
    %0 = arith.index_cast %arg0 : i32 to index
    %1 = arith.index_cast %arg1 : i32 to index
    %2 = memref.load %arg2[%0, %1] : memref<3x3xi32, #tpu.memory_space<smem>>
    %c0_i32 = arith.constant 0 : i32
    %c0_i32_0 = arith.constant 0 : i32
    %c0_i32_1 = arith.constant 0 : i32
    return %arg0, %2, %c0_i32, %c0_i32_0 : i32, i32, i32, i32
  }
  func.func @transform_1(%arg0: i32, %arg1: i32, %arg2: memref<3x3xi32, #tpu.memory_space<smem>>, %arg3: memref<3xi32, #tpu.memory_space<smem>>) -> (i32, i32) {
    %c0_i32 = arith.constant 0 : i32
    %c0_i32_0 = arith.constant 0 : i32
    %c0_i32_1 = arith.constant 0 : i32
    return %c0_i32, %c0_i32_0 : i32, i32
  }
  func.func @transform_2(%arg0: i32, %arg1: i32, %arg2: memref<3x3xi32, #tpu.memory_space<smem>>, %arg3: memref<3xi32, #tpu.memory_space<smem>>) -> (i32, i32) {
    %c0_i32 = arith.constant 0 : i32
    %c0_i32_0 = arith.constant 0 : i32
    return %arg0, %c0_i32 : i32, i32
  }
  func.func @transform_3(%arg0: i32, %arg1: i32, %arg2: memref<3x3xi32, #tpu.memory_space<smem>>, %arg3: memref<3xi32, #tpu.memory_space<smem>>) -> (i32, i32) {
    %c0_i32 = arith.constant 0 : i32
    %c0_i32_0 = arith.constant 0 : i32
    %c0_i32_1 = arith.constant 0 : i32
    return %c0_i32, %c0_i32_0 : i32, i32
  }
  func.func @transform_4(%arg0: i32, %arg1: i32, %arg2: memref<3x3xi32, #tpu.memory_space<smem>>, %arg3: memref<3xi32, #tpu.memory_space<smem>>) -> (i32, i32) {
    %c0_i32 = arith.constant 0 : i32
    %c0_i32_0 = arith.constant 0 : i32
    %c0_i32_1 = arith.constant 0 : i32
    return %c0_i32, %c0_i32_0 : i32, i32
  }
  func.func @transform_5(%arg0: i32, %arg1: i32, %arg2: memref<3x3xi32, #tpu.memory_space<smem>>, %arg3: memref<3xi32, #tpu.memory_space<smem>>) -> (i32, i32) {
    %c0_i32 = arith.constant 0 : i32
    %c0_i32_0 = arith.constant 0 : i32
    return %arg0, %c0_i32 : i32, i32
  }
}

</mosaic_0001>

<llo_original>
// kernel: tpu_custom_call.1
$region0: #{tpu_custom_call.1}
  #allocation0 [shape = 'u32[]', space=smem, size = 0x4, offset = 0x4, fixed_abs, tag = 'smem constant byte address 0x4 - core index']
  #allocation1 [shape = 'u32[144,128]{1,0:T(1,128)}', space=vmem, size = 0x12000, scoped, tag = 'internal scratch']
  #allocation2 [shape = 'f32[256,128]{1,0:T(8,128)}', space=vmem, size = 0x20000, scoped, tag = 'scratch operand']
  #allocation3 [shape = 's32[1]{0}', space=sflag, size = 0x4, scoped, tag = 'scoped memory for tpu_custom_call.1']
  #allocation4 [shape = 'u8[2048]{0}', space=smem, size = 0x800, scoped, tag = 'prefetched SMEM operand 0']
  #allocation5 [shape = 'u8[512]{0}', space=smem, size = 0x200, scoped, tag = 'prefetched SMEM operand 1']
  %s0 = inlined_call_operand.hbm [shape: s32[3,3], index: 0, kind: input, shape index: {}]
  %s1 = inlined_call_operand.hbm [shape: s32[3], index: 1, kind: input, shape index: {}]
  %s2 = inlined_call_operand.hbm [shape: bf16[3,3,256,256], index: 2, kind: input, shape index: {}]
  %s3 = inlined_call_operand.hbm [shape: bf16[768,128], index: 3, kind: input, shape index: {}]
  %s4 = inlined_call_operand.vmem [shape: f32[768,1], index: 4, kind: input, shape index: {}]
  %s5 = inlined_call_operand.hbm [shape: f32[1,128], index: 5, kind: input, shape index: {}]
  %s6 = inlined_call_operand.hbm [shape: bf16[128,128], index: 6, kind: input, shape index: {}]
  %s7 = inlined_call_operand.hbm [shape: bf16[768,128], index: 7, kind: output, shape index: {}]
  %s8 = sld [smem:[#allocation0]]
  $region81: #{tpu_custom_call.1} parent=0
    _
  %s10 = ssub.s32 1, %s8
  %s11 = scalar_select 0, %s10, %s8
  %13 = dma.hbm_to_smem %s0, 64, [#allocation4], [#allocation3]
  %15 = dma.hbm_to_smem %s1, 16, [#allocation5], [#allocation3]
  %16 = dma.done [#allocation3], 80
  %17 = sfence
  $region1: #{tpu_custom_call.1} parent=0
    #allocation6 [shape = 'u8[262144]{0}', space=vmem, size = 0x40000, scoped, tag = 'input window, operand 2']
    #allocation7 [shape = 's32[2]{0}', space=sflag, size = 0x8, scoped, tag = 'scoped memory for tpu_custom_call.1']
    #allocation8 [shape = 's32[2]{0}', space=sflag, size = 0x8, scoped, tag = 'scoped memory for tpu_custom_call.1']
    #allocation9 [shape = 'u8[196608]{0}', space=vmem, size = 0x30000, scoped, tag = 'input window, operand 3, single buffered']
    #allocation10 [shape = 's32[1]{0}', space=sflag, size = 0x4, scoped, tag = 'scoped memory for tpu_custom_call.1']
    #allocation11 [shape = 'u8[512]{0}', space=vmem, size = 0x400, scoped, tag = 'input window, operand 5, single buffered']
    #allocation12 [shape = 'u8[32768]{0}', space=vmem, size = 0x8000, scoped, tag = 'input window, operand 6, single buffered']
    #allocation13 [shape = 's32[1]{0}', space=sflag, size = 0x4, scoped, tag = 'scoped memory for tpu_custom_call.1']
    #allocation14 [shape = 'u8[131072]{0}', space=vmem, size = 0x20000, scoped, tag = 'output window, operand 0']
    %18 = vsyncpa [#allocation7], 0
    %s19 = scalar_lea.sflag [#allocation7], 1
    %20 = vsyncpa %s19, 0
    %21 = vsyncpa [#allocation10], 0
    %22 = vsyncpa [#allocation13], 0
    %23 = vsyncpa [#allocation8], 0
    %s24 = scalar_lea.sflag [#allocation8], 1
    %25 = vsyncpa %s24, 0
    loop: start=0, step=1, limit=11
    $region2: #{tpu_custom_call.1} parent=1 // loop_pre_header
      _
    $region3: #{tpu_custom_call.1} parent=1 // loop_header
      %s27 = sphi 0, %s31
      %p28 = scmp.ge.s32.totalorder %s27, 11
      %s34 = sphi 0, %s46
      %s35 = sphi 0, %s42
      %s36 = sphi 0, %s34
      %s37 = sphi 0, %s35
      %s38 = sphi 0, %s36
      %s39 = sphi 0, %s37
      %s67 = sphi 0, %s69
      %s70 = sphi 0, %s67
      %s71 = sphi 0, %s70
      %s87 = sphi 0, %s71
      %s91 = sphi 0, %s91
      %s93 = sphi 0, %s91
      %s94 = sphi 0, %s93
      %s108 = sphi 0, %s94
      %s114 = sphi 0, %s116
      %s117 = sphi 0, %s114
      %s118 = sphi 0, %s117
      %s134 = sphi 0, %s118
      %s138 = sphi 0, %s138
      %s140 = sphi 0, %s138
      %s141 = sphi 0, %s140
      %s155 = sphi 0, %s141
      %s159 = sphi 0, %s159
      %s161 = sphi 0, %s159
      %s162 = sphi 0, %s161
      %s176 = sphi 0, %s162
      %s182 = sphi 0, %s184
      %s185 = sphi 0, %s182
      %s186 = sphi 0, %s185
      %s202 = sphi 0, %s186
    $region4: #{tpu_custom_call.1} parent=1 // loop_header_branch
      %30 = sbr.rel (%p28) target = $region8
    $region5: #{tpu_custom_call.1} parent=1 // loop_body
      %s32 = ssub.s32 %s27, 1
      %s33 = ssub.s32 %s27, 2
      %s40 = sadd.s32 1, %s35
      %p41 = scmp.ge.s32.totalorder %s40, 3
      %s42 = scalar_select %p41, 0, %s40
      %s43 = sadd.s32 1, %s34
      %s44 = scalar_select %p41, %s43, %s34
      %p45 = scmp.ge.s32.totalorder %s44, 3
      %s46 = scalar_select %p45, 0, %s44
      %s47 = sshra.s32 %s35, 7
      %s48 = sand.u32 %s35, 127
      %s49 = sadd.s32 %s47, %s34
      %s50 = smul.u32 %s49, 128
      %s51 = sshra.s32 %s35, 7
      %s52 = sand.u32 %s35, 127
      %s53 = sadd.s32 %s50, %s52
      %s54 = sld [smem:[#allocation4 + %s53]]
      %s55 = sshra.s32 %s42, 7
      %s56 = sand.u32 %s42, 127
      %s57 = sadd.s32 %s55, %s46
      %s58 = smul.u32 %s57, 128
      %s59 = sshra.s32 %s42, 7
      %s60 = sand.u32 %s42, 127
      %s61 = sadd.s32 %s58, %s60
      %s62 = sld [smem:[#allocation4 + %s61]]
      %s63 = ssub.s32 %s34, %s46
      %s64 = ssub.s32 %s54, %s62
      %s65 = sor.u32 %s63, %s64
      %p66 = scmp.eq.s32.totalorder %s65, 0
      %s68 = sadd.s32 %s67, 1
      %s69 = scalar_select %p66, %s67, %s68
      %p72 = pneg %p66
      %p73 = scmp.eq.s32.totalorder %s27, 8
      %p74 = por %p72, %p73
      %p75 = scmp.ne.s32.totalorder %s67, %s70
      %p76 = scmp.eq.s32.totalorder %s27, 0
      %p77 = por %p75, %p76
      %p78 = scmp.ne.s32.totalorder %s67, %s70
      %p79 = scmp.eq.s32.totalorder %s32, 8
      %p80 = por %p78, %p79
      %p81 = scmp.ne.s32.totalorder %s70, %s71
      %p82 = scmp.eq.s32.totalorder %s32, 0
      %p83 = por %p81, %p82
      %p84 = scmp.ne.s32.totalorder %s70, %s71
      %p85 = scmp.eq.s32.totalorder %s33, 8
      %p86 = por %p84, %p85
      %p88 = scmp.ne.s32.totalorder %s71, %s87
      %p89 = scmp.eq.s32.totalorder %s33, 0
      %p90 = por %p88, %p89
      %s92 = sadd.s32 %s91, 1
      %p95 = scmp.eq.s32.totalorder %s27, 8
      %p96 = scmp.ne.s32.totalorder %s91, %s93
      %p97 = scmp.eq.s32.totalorder %s27, 0
      %p98 = por %p96, %p97
      %p99 = scmp.ne.s32.totalorder %s91, %s93
      %p100 = scmp.eq.s32.totalorder %s32, 8
      %p101 = por %p99, %p100
      %p102 = scmp.ne.s32.totalorder %s93, %s94
      %p103 = scmp.eq.s32.totalorder %s32, 0
      %p104 = por %p102, %p103
      %p105 = scmp.ne.s32.totalorder %s93, %s94
      %p106 = scmp.eq.s32.totalorder %s33, 8
      %p107 = por %p105, %p106
      %p109 = scmp.ne.s32.totalorder %s94, %s108
      %p110 = scmp.eq.s32.totalorder %s33, 0
      %p111 = por %p109, %p110
      %s112 = ssub.s32 %s34, %s46
      %p113 = scmp.eq.s32.totalorder %s112, 0
      %s115 = sadd.s32 %s114, 1
      %s116 = scalar_select %p113, %s114, %s115
      %p119 = pneg %p113
      %p120 = scmp.eq.s32.totalorder %s27, 8
      %p121 = por %p119, %p120
      %p122 = scmp.ne.s32.totalorder %s114, %s117
      %p123 = scmp.eq.s32.totalorder %s27, 0
      %p124 = por %p122, %p123
      %p125 = scmp.ne.s32.totalorder %s114, %s117
      %p126 = scmp.eq.s32.totalorder %s32, 8
      %p127 = por %p125, %p126
      %p128 = scmp.ne.s32.totalorder %s117, %s118
      %p129 = scmp.eq.s32.totalorder %s32, 0
      %p130 = por %p128, %p129
      %p131 = scmp.ne.s32.totalorder %s117, %s118
      %p132 = scmp.eq.s32.totalorder %s33, 8
      %p133 = por %p131, %p132
      %p135 = scmp.ne.s32.totalorder %s118, %s134
      %p136 = scmp.eq.s32.totalorder %s33, 0
      %p137 = por %p135, %p136
      %s139 = sadd.s32 %s138, 1
      %p142 = scmp.eq.s32.totalorder %s27, 8
      %p143 = scmp.ne.s32.totalorder %s138, %s140
      %p144 = scmp.eq.s32.totalorder %s27, 0
      %p145 = por %p143, %p144
      %p146 = scmp.ne.s32.totalorder %s138, %s140
      %p147 = scmp.eq.s32.totalorder %s32, 8
      %p148 = por %p146, %p147
      %p149 = scmp.ne.s32.totalorder %s140, %s141
      %p150 = scmp.eq.s32.totalorder %s32, 0
      %p151 = por %p149, %p150
      %p152 = scmp.ne.s32.totalorder %s140, %s141
      %p153 = scmp.eq.s32.totalorder %s33, 8
      %p154 = por %p152, %p153
      %p156 = scmp.ne.s32.totalorder %s141, %s155
      %p157 = scmp.eq.s32.totalorder %s33, 0
      %p158 = por %p156, %p157
      %s160 = sadd.s32 %s159, 1
      %p163 = scmp.eq.s32.totalorder %s27, 8
      %p164 = scmp.ne.s32.totalorder %s159, %s161
      %p165 = scmp.eq.s32.totalorder %s27, 0
      %p166 = por %p164, %p165
      %p167 = scmp.ne.s32.totalorder %s159, %s161
      %p168 = scmp.eq.s32.totalorder %s32, 8
      %p169 = por %p167, %p168
      %p170 = scmp.ne.s32.totalorder %s161, %s162
      %p171 = scmp.eq.s32.totalorder %s32, 0
      %p172 = por %p170, %p171
      %p173 = scmp.ne.s32.totalorder %s161, %s162
      %p174 = scmp.eq.s32.totalorder %s33, 8
      %p175 = por %p173, %p174
      %p177 = scmp.ne.s32.totalorder %s162, %s176
      %p178 = scmp.eq.s32.totalorder %s33, 0
      %p179 = por %p177, %p178
      %s180 = ssub.s32 %s34, %s46
      %p181 = scmp.eq.s32.totalorder %s180, 0
      %s183 = sadd.s32 %s182, 1
      %s184 = scalar_select %p181, %s182, %s183
      %p187 = pneg %p181
      %p188 = scmp.eq.s32.totalorder %s27, 8
      %p189 = por %p187, %p188
      %p190 = scmp.ne.s32.totalorder %s182, %s185
      %p191 = scmp.eq.s32.totalorder %s27, 0
      %p192 = por %p190, %p191
      %p193 = scmp.ne.s32.totalorder %s182, %s185
      %p194 = scmp.eq.s32.totalorder %s32, 8
      %p195 = por %p193, %p194
      %p196 = scmp.ne.s32.totalorder %s185, %s186
      %p197 = scmp.eq.s32.totalorder %s32, 0
      %p198 = por %p196, %p197
      %p199 = scmp.ne.s32.totalorder %s185, %s186
      %p200 = scmp.eq.s32.totalorder %s33, 8
      %p201 = por %p199, %p200
      %p203 = scmp.ne.s32.totalorder %s186, %s202
      %p204 = scmp.eq.s32.totalorder %s33, 0
      %p205 = por %p203, %p204
      %p206 = scmp.le.s32.totalorder 1, %s27
      %p207 = scmp.lt.s32.totalorder %s27, 10
      %p208 = pnand %p206, %p207
      %p209 = pneg %p208
      // Predicated region
      $region9: #{tpu_custom_call.1} parent=5 // pred_check
        _
      $region10: #{tpu_custom_call.1} parent=5 // pred_check_branch
        %211 = sbr.rel (%p208) target = $region12
      $region11: #{tpu_custom_call.1} parent=5 // pred_region
        %s212 = ssub.s32 %s27, 1
        // Predicated region
        $region13: #{tpu_custom_call.1} parent=11 // pred_check
          %p213 = pneg %p104
        $region14: #{tpu_custom_call.1} parent=11 // pred_check_branch
          %215 = sbr.rel (%p213) target = $region16
        $region15: #{tpu_custom_call.1} parent=11 // pred_region
          %s217 = ssub.s32 6144, 6144
          %218 = vsyncadd [#allocation10], %s217
          %s219 = sshll.u32 [#allocation9], 4
          %s220 = int_to_ptr.vmem [resolvable:$true] %s219
          %225 = dma.hbm_to_vmem [thread:$0]  %s3, 6144, %s220, [#allocation10], 64, 64, 4
        $region16: #{tpu_custom_call.1} parent=11 // pred_fallthru
          _
        // Predicated region
        $region17: #{tpu_custom_call.1} parent=11 // pred_check
          %p226 = pneg %p151
        $region18: #{tpu_custom_call.1} parent=11 // pred_check_branch
          %228 = sbr.rel (%p226) target = $region20
        $region19: #{tpu_custom_call.1} parent=11 // pred_region
          %s230 = ssub.s32 16, 16
          %231 = vsyncadd [#allocation10], %s230
          %s233 = sshll.u32 [#allocation11], 4
          %s234 = int_to_ptr.vmem [resolvable:$true] %s233
          %236 = dma.hbm_to_vmem [thread:$0]  %s5, 16, %s234, [#allocation10]
        $region20: #{tpu_custom_call.1} parent=11 // pred_fallthru
          _
        // Predicated region
        $region21: #{tpu_custom_call.1} parent=11 // pred_check
          %p237 = pneg %p172
        $region22: #{tpu_custom_call.1} parent=11 // pred_check_branch
          %239 = sbr.rel (%p237) target = $region24
        $region23: #{tpu_custom_call.1} parent=11 // pred_region
          %s241 = ssub.s32 1024, 1024
          %242 = vsyncadd [#allocation13], %s241
          %s243 = sshll.u32 [#allocation12], 4
          %s244 = int_to_ptr.vmem [resolvable:$true] %s243
          %249 = dma.hbm_to_vmem [thread:$0]  %s6, 1024, %s244, [#allocation13], 64, 64, 4
        $region24: #{tpu_custom_call.1} parent=11 // pred_fallthru
          _
      $region12: #{tpu_custom_call.1} parent=5 // pred_fallthru
        _
      %p250 = scmp.lt.s32.totalorder %s27, 9
      // Predicated region
      $region25: #{tpu_custom_call.1} parent=5 // pred_check
        %p251 = pneg %p250
      $region26: #{tpu_custom_call.1} parent=5 // pred_check_branch
        %253 = sbr.rel (%p251) target = $region28
      $region27: #{tpu_custom_call.1} parent=5 // pred_region
        // Predicated region
        $region29: #{tpu_custom_call.1} parent=27 // pred_check
          %p254 = pneg %p77
        $region30: #{tpu_custom_call.1} parent=27 // pred_check_branch
          %256 = sbr.rel (%p254) target = $region32
        $region31: #{tpu_custom_call.1} parent=27 // pred_region
          %s257 = sand.u32 %s67, 1
          %s258 = scalar_lea.sflag [#allocation7], %s257
          %s259 = sand.u32 %s67, 1
          %s260 = smul.addr %s259, 256
          %s261 = scalar_lea.vmem [#allocation6], %s260
          %s262 = sshra.s32 %s35, 7
          %s263 = sand.u32 %s35, 127
          %s264 = sadd.s32 %s262, %s34
          %s265 = smul.u32 %s264, 128
          %s266 = sshra.s32 %s35, 7
          %s267 = sand.u32 %s35, 127
          %s268 = sadd.s32 %s265, %s267
          %s269 = sld [smem:[#allocation4 + %s268]]
          %s271 = ssub.s32 4096, 4096
          %272 = vsyncadd %s258, %s271
          %s273 = smul.addr %s269, 64
          %s274 = smul.addr %s34, 192
          %s275 = sadd.s32 %s273, %s274
          %s276 = smul.addr %s275, 64
          %s277 = scalar_lea.hbm %s2, %s276
          %s278 = sshll.u32 %s261, 4
          %s279 = int_to_ptr.vmem [resolvable:$true] %s278
          %284 = dma.hbm_to_vmem [thread:$0]  %s277, 4096, %s279, %s258, 128, 128, 8
        $region32: #{tpu_custom_call.1} parent=27 // pred_fallthru
          _
        // Predicated region
        $region33: #{tpu_custom_call.1} parent=27 // pred_check
          %p285 = pneg %p124
        $region34: #{tpu_custom_call.1} parent=27 // pred_check_branch
          %287 = sbr.rel (%p285) target = $region36
        $region35: #{tpu_custom_call.1} parent=27 // pred_region
          %s288 = smul.u32 32, %s34
          %p289 = scmp.lt.s32.totalorder %s288, 95
          %s290 = scalar_select %p289, %s288, 95
          %s291 = smul.addr %s290, 8
          %s292 = scalar_lea.vmem %s4, %s291
          %s293 = smul.u32 32, %s34
        $region36: #{tpu_custom_call.1} parent=27 // pred_fallthru
          _
      $region28: #{tpu_custom_call.1} parent=5 // pred_fallthru
        _
      %p294 = scmp.le.s32.totalorder 1, %s27
      %p295 = scmp.lt.s32.totalorder %s27, 10
      %p296 = pnand %p294, %p295
      %p297 = pneg %p296
      // Predicated region
      $region37: #{tpu_custom_call.1} parent=5 // pred_check
        _
      $region38: #{tpu_custom_call.1} parent=5 // pred_check_branch
        %299 = sbr.rel (%p296) target = $region40
      $region39: #{tpu_custom_call.1} parent=5 // pred_region
        %s300 = ssub.s32 %s27, 1
        %s301 = sand.u32 %s70, 1
        %s302 = scalar_lea.sflag [#allocation7], %s301
        %s303 = sand.u32 %s70, 1
        %s304 = smul.addr %s303, 256
        %s305 = scalar_lea.vmem [#allocation6], %s304
        // Predicated region
        $region41: #{tpu_custom_call.1} parent=39 // pred_check
          %p306 = pneg %p83
        $region42: #{tpu_custom_call.1} parent=39 // pred_check_branch
          %308 = sbr.rel (%p306) target = $region44
        $region43: #{tpu_custom_call.1} parent=39 // pred_region
          %309 = dma.done %s302, 4096
        $region44: #{tpu_custom_call.1} parent=39 // pred_fallthru
          _
        // Predicated region
        $region45: #{tpu_custom_call.1} parent=39 // pred_check
          %p310 = pneg %p104
        $region46: #{tpu_custom_call.1} parent=39 // pred_check_branch
          %312 = sbr.rel (%p310) target = $region48
        $region47: #{tpu_custom_call.1} parent=39 // pred_region
          %313 = dma.done [#allocation10], 6144
        $region48: #{tpu_custom_call.1} parent=39 // pred_fallthru
          _
        // Predicated region
        $region49: #{tpu_custom_call.1} parent=39 // pred_check
          %p314 = pneg %p151
        $region50: #{tpu_custom_call.1} parent=39 // pred_check_branch
          %316 = sbr.rel (%p314) target = $region52
        $region51: #{tpu_custom_call.1} parent=39 // pred_region
          %317 = dma.done [#allocation10], 16
        $region52: #{tpu_custom_call.1} parent=39 // pred_fallthru
          _
        // Predicated region
        $region53: #{tpu_custom_call.1} parent=39 // pred_check
          %p318 = pneg %p172
        $region54: #{tpu_custom_call.1} parent=39 // pred_check_branch
          %320 = sbr.rel (%p318) target = $region56
        $region55: #{tpu_custom_call.1} parent=39 // pred_region
          %321 = dma.done [#allocation13], 1024
        $region56: #{tpu_custom_call.1} parent=39 // pred_fallthru
          _
        %s322 = sand.u32 %s70, 1
        %s323 = scalar_lea.sflag [#allocation7], %s322
        %s324 = sand.u32 %s70, 1
        %s325 = smul.addr %s324, 256
        %s326 = scalar_lea.vmem [#allocation6], %s325
        %p327 = pneg %p83
        %p328 = pneg %p80
        %p329 = pneg %p104
        %p330 = pneg %p101
        %s331 = smul.u32 32, %s36
        %p332 = scmp.lt.s32.totalorder %s331, 95
        %s333 = scalar_select %p332, %s331, 95
        %s334 = smul.addr %s333, 8
        %s335 = scalar_lea.vmem %s4, %s334
        %p336 = pneg %p130
        %p337 = pneg %p127
        %p338 = pneg %p151
        %p339 = pneg %p148
        %p340 = pneg %p172
        %p341 = pneg %p169
        %p342 = pneg %p198
        %p343 = pneg %p195
        %s344 = sand.u32 %s185, 1
        %s345 = scalar_lea.sflag [#allocation8], %s344
        %s346 = sand.u32 %s185, 1
        %s347 = smul.addr %s346, 128
        %s348 = scalar_lea.vmem [#allocation14], %s347
        %s349 = sshra.s32 %s37, 7
        %s350 = sand.u32 %s37, 127
        %s351 = sadd.s32 %s349, %s36
        %s352 = smul.u32 %s351, 128
        %s353 = sshra.s32 %s37, 7
        %s354 = sand.u32 %s37, 127
        %s355 = sadd.s32 %s352, %s354
        %s356 = sld [smem:[#allocation4 + %s355]]
        %s357 = smul.u32 32, %s36
        %p358 = scmp.lt.s32.totalorder %s357, 95
        %s359 = scalar_select %p358, %s357, 95
        %s360 = smul.addr %s359, 8
        %s361 = scalar_lea.vmem %s4, %s360
        %s362 = smul.u32 32, %s36
        %s363 = smul.u32 32, %s36
        %p365 = scmp.eq.s32.totalorder %s37, 0
        // Predicated region
        $region57: #{tpu_custom_call.1} parent=39 // pred_check
          %p366 = pneg %p365
        $region58: #{tpu_custom_call.1} parent=39 // pred_check_branch
          %368 = sbr.rel (%p366) target = $region60
        $region59: #{tpu_custom_call.1} parent=39 // pred_region
          %369 = vst [vmem:[#allocation2] sm:$0xff] 0.0
          %370 = vst [vmem:[#allocation2 + $0x8] sm:$0xff] 0.0
          %371 = vst [vmem:[#allocation2 + $0x10] sm:$0xff] 0.0
          %372 = vst [vmem:[#allocation2 + $0x18] sm:$0xff] 0.0
          %373 = vst [vmem:[#allocation2 + $0x20] sm:$0xff] 0.0
          %374 = vst [vmem:[#allocation2 + $0x28] sm:$0xff] 0.0
          %375 = vst [vmem:[#allocation2 + $0x30] sm:$0xff] 0.0
          %376 = vst [vmem:[#allocation2 + $0x38] sm:$0xff] 0.0
          %377 = vst [vmem:[#allocation2 + $0x40] sm:$0xff] 0.0
          %378 = vst [vmem:[#allocation2 + $0x48] sm:$0xff] 0.0
          %379 = vst [vmem:[#allocation2 + $0x50] sm:$0xff] 0.0
          %380 = vst [vmem:[#allocation2 + $0x58] sm:$0xff] 0.0
          %381 = vst [vmem:[#allocation2 + $0x60] sm:$0xff] 0.0
          %382 = vst [vmem:[#allocation2 + $0x68] sm:$0xff] 0.0
          %383 = vst [vmem:[#allocation2 + $0x70] sm:$0xff] 0.0
          %384 = vst [vmem:[#allocation2 + $0x78] sm:$0xff] 0.0
          %385 = vst [vmem:[#allocation2 + $0x80] sm:$0xff] 0.0
          %386 = vst [vmem:[#allocation2 + $0x88] sm:$0xff] 0.0
          %387 = vst [vmem:[#allocation2 + $0x90] sm:$0xff] 0.0
          %388 = vst [vmem:[#allocation2 + $0x98] sm:$0xff] 0.0
          %389 = vst [vmem:[#allocation2 + $0xa0] sm:$0xff] 0.0
          %390 = vst [vmem:[#allocation2 + $0xa8] sm:$0xff] 0.0
          %391 = vst [vmem:[#allocation2 + $0xb0] sm:$0xff] 0.0
          %392 = vst [vmem:[#allocation2 + $0xb8] sm:$0xff] 0.0
          %393 = vst [vmem:[#allocation2 + $0xc0] sm:$0xff] 0.0
          %394 = vst [vmem:[#allocation2 + $0xc8] sm:$0xff] 0.0
          %395 = vst [vmem:[#allocation2 + $0xd0] sm:$0xff] 0.0
          %396 = vst [vmem:[#allocation2 + $0xd8] sm:$0xff] 0.0
          %397 = vst [vmem:[#allocation2 + $0xe0] sm:$0xff] 0.0
          %398 = vst [vmem:[#allocation2 + $0xe8] sm:$0xff] 0.0
          %399 = vst [vmem:[#allocation2 + $0xf0] sm:$0xff] 0.0
          %400 = vst [vmem:[#allocation2 + $0xf8] sm:$0xff] 0.0
        $region60: #{tpu_custom_call.1} parent=39 // pred_fallthru
          _
        %s401 = sld [smem:[#allocation5 + %s36]]
        %p402 = scmp.lt.s32.totalorder %s37, %s401
        // Predicated region
        $region61: #{tpu_custom_call.1} parent=39 // pred_check
          %p403 = pneg %p402
        $region62: #{tpu_custom_call.1} parent=39 // pred_check_branch
          %405 = sbr.rel (%p403) target = $region64
        $region63: #{tpu_custom_call.1} parent=39 // pred_region
          %s406 = sshra.s32 %s37, 7
          %s407 = sand.u32 %s37, 127
          %s408 = sadd.s32 %s406, %s36
          %s409 = smul.u32 %s408, 128
          %s410 = sshra.s32 %s37, 7
          %s411 = sand.u32 %s37, 127
          %s412 = sadd.s32 %s409, %s411
          %s413 = sld [smem:[#allocation4 + %s412]]
          %s414 = smul.u32 %s413, 256
          %s415 = sshra.s32 %s414, 3
          %s416 = sand.u32 %s414, 7
          %s417 = smul.addr %s415, 4
          %s418 = scalar_lea.vmem [#allocation9], %s417
          %v419 = vld [vmem:[%s418] sm:$0xf]
          %v420 = vld [vmem:[%s418 + $0x4] sm:$0xf]
          %v421 = vld [vmem:[%s418 + $0x8] sm:$0xf]
          %v422 = vld [vmem:[%s418 + $0xc] sm:$0xf]
          %v423 = vld [vmem:[%s418 + $0x10] sm:$0xf]
          %v424 = vld [vmem:[%s418 + $0x14] sm:$0xf]
          %v425 = vld [vmem:[%s418 + $0x18] sm:$0xf]
          %v426 = vld [vmem:[%s418 + $0x1c] sm:$0xf]
          %v427 = vld [vmem:[%s418 + $0x20] sm:$0xf]
          %v428 = vld [vmem:[%s418 + $0x24] sm:$0xf]
          %v429 = vld [vmem:[%s418 + $0x28] sm:$0xf]
          %v430 = vld [vmem:[%s418 + $0x2c] sm:$0xf]
          %v431 = vld [vmem:[%s418 + $0x30] sm:$0xf]
          %v432 = vld [vmem:[%s418 + $0x34] sm:$0xf]
          %v433 = vld [vmem:[%s418 + $0x38] sm:$0xf]
          %v434 = vld [vmem:[%s418 + $0x3c] sm:$0xf]
          %v435 = vld [vmem:[%s418 + $0x40] sm:$0xf]
          %v436 = vld [vmem:[%s418 + $0x44] sm:$0xf]
          %v437 = vld [vmem:[%s418 + $0x48] sm:$0xf]
          %v438 = vld [vmem:[%s418 + $0x4c] sm:$0xf]
          %v439 = vld [vmem:[%s418 + $0x50] sm:$0xf]
          %v440 = vld [vmem:[%s418 + $0x54] sm:$0xf]
          %v441 = vld [vmem:[%s418 + $0x58] sm:$0xf]
          %v442 = vld [vmem:[%s418 + $0x5c] sm:$0xf]
          %v443 = vld [vmem:[%s418 + $0x60] sm:$0xf]
          %v444 = vld [vmem:[%s418 + $0x64] sm:$0xf]
          %v445 = vld [vmem:[%s418 + $0x68] sm:$0xf]
          %v446 = vld [vmem:[%s418 + $0x6c] sm:$0xf]
          %v447 = vld [vmem:[%s418 + $0x70] sm:$0xf]
          %v448 = vld [vmem:[%s418 + $0x74] sm:$0xf]
          %v449 = vld [vmem:[%s418 + $0x78] sm:$0xf]
          %v450 = vld [vmem:[%s418 + $0x7c] sm:$0xf]
          %v451 = vld [vmem:[#allocation2] sm:$0xff]
          %v452 = vld [vmem:[#allocation2 + $0x8] sm:$0xff]
          %v453 = vld [vmem:[#allocation2 + $0x10] sm:$0xff]
          %v454 = vld [vmem:[#allocation2 + $0x18] sm:$0xff]
          %v455 = vld [vmem:[#allocation2 + $0x20] sm:$0xff]
          %v456 = vld [vmem:[#allocation2 + $0x28] sm:$0xff]
          %v457 = vld [vmem:[#allocation2 + $0x30] sm:$0xff]
          %v458 = vld [vmem:[#allocation2 + $0x38] sm:$0xff]
          %v459 = vld [vmem:[#allocation2 + $0x40] sm:$0xff]
          %v460 = vld [vmem:[#allocation2 + $0x48] sm:$0xff]
          %v461 = vld [vmem:[#allocation2 + $0x50] sm:$0xff]
          %v462 = vld [vmem:[#allocation2 + $0x58] sm:$0xff]
          %v463 = vld [vmem:[#allocation2 + $0x60] sm:$0xff]
          %v464 = vld [vmem:[#allocation2 + $0x68] sm:$0xff]
          %v465 = vld [vmem:[#allocation2 + $0x70] sm:$0xff]
          %v466 = vld [vmem:[#allocation2 + $0x78] sm:$0xff]
          %v467 = vld [vmem:[#allocation2 + $0x80] sm:$0xff]
          %v468 = vld [vmem:[#allocation2 + $0x88] sm:$0xff]
          %v469 = vld [vmem:[#allocation2 + $0x90] sm:$0xff]
          %v470 = vld [vmem:[#allocation2 + $0x98] sm:$0xff]
          %v471 = vld [vmem:[#allocation2 + $0xa0] sm:$0xff]
          %v472 = vld [vmem:[#allocation2 + $0xa8] sm:$0xff]
          %v473 = vld [vmem:[#allocation2 + $0xb0] sm:$0xff]
          %v474 = vld [vmem:[#allocation2 + $0xb8] sm:$0xff]
          %v475 = vld [vmem:[#allocation2 + $0xc0] sm:$0xff]
          %v476 = vld [vmem:[#allocation2 + $0xc8] sm:$0xff]
          %v477 = vld [vmem:[#allocation2 + $0xd0] sm:$0xff]
          %v478 = vld [vmem:[#allocation2 + $0xd8] sm:$0xff]
          %v479 = vld [vmem:[#allocation2 + $0xe0] sm:$0xff]
          %v480 = vld [vmem:[#allocation2 + $0xe8] sm:$0xff]
          %v481 = vld [vmem:[#allocation2 + $0xf0] sm:$0xff]
          %v482 = vld [vmem:[#allocation2 + $0xf8] sm:$0xff]
          %v483 = vld [vmem:[%s305] sm:$0xff]
          %v484 = vld [vmem:[%s305 + $0x8] sm:$0xff]
          %v485 = vld [vmem:[%s305 + $0x10] sm:$0xff]
          %v486 = vld [vmem:[%s305 + $0x18] sm:$0xff]
          %v487 = vld [vmem:[%s305 + $0x20] sm:$0xff]
          %v488 = vld [vmem:[%s305 + $0x28] sm:$0xff]
          %v489 = vld [vmem:[%s305 + $0x30] sm:$0xff]
          %v490 = vld [vmem:[%s305 + $0x38] sm:$0xff]
          %v491 = vld [vmem:[%s305 + $0x40] sm:$0xff]
          %v492 = vld [vmem:[%s305 + $0x48] sm:$0xff]
          %v493 = vld [vmem:[%s305 + $0x50] sm:$0xff]
          %v494 = vld [vmem:[%s305 + $0x58] sm:$0xff]
          %v495 = vld [vmem:[%s305 + $0x60] sm:$0xff]
          %v496 = vld [vmem:[%s305 + $0x68] sm:$0xff]
          %v497 = vld [vmem:[%s305 + $0x70] sm:$0xff]
          %v498 = vld [vmem:[%s305 + $0x78] sm:$0xff]
          %v499 = vld [vmem:[%s305 + $0x80] sm:$0xff]
          %v500 = vld [vmem:[%s305 + $0x88] sm:$0xff]
          %v501 = vld [vmem:[%s305 + $0x90] sm:$0xff]
          %v502 = vld [vmem:[%s305 + $0x98] sm:$0xff]
          %v503 = vld [vmem:[%s305 + $0xa0] sm:$0xff]
          %v504 = vld [vmem:[%s305 + $0xa8] sm:$0xff]
          %v505 = vld [vmem:[%s305 + $0xb0] sm:$0xff]
          %v506 = vld [vmem:[%s305 + $0xb8] sm:$0xff]
          %v507 = vld [vmem:[%s305 + $0xc0] sm:$0xff]
          %v508 = vld [vmem:[%s305 + $0xc8] sm:$0xff]
          %v509 = vld [vmem:[%s305 + $0xd0] sm:$0xff]
          %v510 = vld [vmem:[%s305 + $0xd8] sm:$0xff]
          %v511 = vld [vmem:[%s305 + $0xe0] sm:$0xff]
          %v512 = vld [vmem:[%s305 + $0xe8] sm:$0xff]
          %v513 = vld [vmem:[%s305 + $0xf0] sm:$0xff]
          %v514 = vld [vmem:[%s305 + $0xf8] sm:$0xff]
          %v547 = vunpack.c.l.b16 %v483
          %v548 = vunpack.c.h.b16 %v483
          %v549 = vunpack.c.l.b16 %v484
          %v550 = vunpack.c.h.b16 %v484
          %v551 = vunpack.c.l.b16 %v485
          %v552 = vunpack.c.h.b16 %v485
          %v553 = vunpack.c.l.b16 %v486
          %v554 = vunpack.c.h.b16 %v486
          %v555 = vunpack.c.l.b16 %v487
          %v556 = vunpack.c.h.b16 %v487
          %v557 = vunpack.c.l.b16 %v488
          %v558 = vunpack.c.h.b16 %v488
          %v559 = vunpack.c.l.b16 %v489
          %v560 = vunpack.c.h.b16 %v489
          %v561 = vunpack.c.l.b16 %v490
          %v562 = vunpack.c.h.b16 %v490
          %v563 = vunpack.c.l.b16 %v491
          %v564 = vunpack.c.h.b16 %v491
          %v565 = vunpack.c.l.b16 %v492
          %v566 = vunpack.c.h.b16 %v492
          %v567 = vunpack.c.l.b16 %v493
          %v568 = vunpack.c.h.b16 %v493
          %v569 = vunpack.c.l.b16 %v494
          %v570 = vunpack.c.h.b16 %v494
          %v571 = vunpack.c.l.b16 %v495
          %v572 = vunpack.c.h.b16 %v495
          %v573 = vunpack.c.l.b16 %v496
          %v574 = vunpack.c.h.b16 %v496
          %v575 = vunpack.c.l.b16 %v497
          %v576 = vunpack.c.h.b16 %v497
          %v577 = vunpack.c.l.b16 %v498
          %v578 = vunpack.c.h.b16 %v498
          %v579 = vunpack.c.l.b16 %v499
          %v580 = vunpack.c.h.b16 %v499
          %v581 = vunpack.c.l.b16 %v500
          %v582 = vunpack.c.h.b16 %v500
          %v583 = vunpack.c.l.b16 %v501
          %v584 = vunpack.c.h.b16 %v501
          %v585 = vunpack.c.l.b16 %v502
          %v586 = vunpack.c.h.b16 %v502
          %v587 = vunpack.c.l.b16 %v503
          %v588 = vunpack.c.h.b16 %v503
          %v589 = vunpack.c.l.b16 %v504
          %v590 = vunpack.c.h.b16 %v504
          %v591 = vunpack.c.l.b16 %v505
          %v592 = vunpack.c.h.b16 %v505
          %v593 = vunpack.c.l.b16 %v506
          %v594 = vunpack.c.h.b16 %v506
          %v595 = vunpack.c.l.b16 %v507
          %v596 = vunpack.c.h.b16 %v507
          %v597 = vunpack.c.l.b16 %v508
          %v598 = vunpack.c.h.b16 %v508
          %v599 = vunpack.c.l.b16 %v509
          %v600 = vunpack.c.h.b16 %v509
          %v601 = vunpack.c.l.b16 %v510
          %v602 = vunpack.c.h.b16 %v510
          %v603 = vunpack.c.l.b16 %v511
          %v604 = vunpack.c.h.b16 %v511
          %v605 = vunpack.c.l.b16 %v512
          %v606 = vunpack.c.h.b16 %v512
          %v607 = vunpack.c.l.b16 %v513
          %v608 = vunpack.c.h.b16 %v513
          %v609 = vunpack.c.l.b16 %v514
          %v610 = vunpack.c.h.b16 %v514
          %v611 = vpack.c.b16 %v549, %v547
          %v612 = vpack.c.b16 %v550, %v548
          %v613 = vpack.c.b16 %v553, %v551
          %v614 = vpack.c.b16 %v554, %v552
          %v615 = vpack.c.b16 %v557, %v555
          %v616 = vpack.c.b16 %v558, %v556
          %v617 = vpack.c.b16 %v561, %v559
          %v618 = vpack.c.b16 %v562, %v560
          %v619 = vpack.c.b16 %v565, %v563
          %v620 = vpack.c.b16 %v566, %v564
          %v621 = vpack.c.b16 %v569, %v567
          %v622 = vpack.c.b16 %v570, %v568
          %v623 = vpack.c.b16 %v573, %v571
          %v624 = vpack.c.b16 %v574, %v572
          %v625 = vpack.c.b16 %v577, %v575
          %v626 = vpack.c.b16 %v578, %v576
          %v627 = vpack.c.b16 %v581, %v579
          %v628 = vpack.c.b16 %v582, %v580
          %v629 = vpack.c.b16 %v585, %v583
          %v630 = vpack.c.b16 %v586, %v584
          %v631 = vpack.c.b16 %v589, %v587
          %v632 = vpack.c.b16 %v590, %v588
          %v633 = vpack.c.b16 %v593, %v591
          %v634 = vpack.c.b16 %v594, %v592
          %v635 = vpack.c.b16 %v597, %v595
          %v636 = vpack.c.b16 %v598, %v596
          %v637 = vpack.c.b16 %v601, %v599
          %v638 = vpack.c.b16 %v602, %v600
          %v639 = vpack.c.b16 %v605, %v603
          %v640 = vpack.c.b16 %v606, %v604
          %v641 = vpack.c.b16 %v609, %v607
          %v642 = vpack.c.b16 %v610, %v608
          %v707 = vunpack.c.l.b16 %v419
          %v708 = vunpack.c.l.b16 %v420
          %v709 = vunpack.c.l.b16 %v421
          %v710 = vunpack.c.l.b16 %v422
          %v711 = vunpack.c.l.b16 %v423
          %v712 = vunpack.c.l.b16 %v424
          %v713 = vunpack.c.l.b16 %v425
          %v714 = vunpack.c.l.b16 %v426
          %v715 = vunpack.c.l.b16 %v427
          %v716 = vunpack.c.l.b16 %v428
          %v717 = vunpack.c.l.b16 %v429
          %v718 = vunpack.c.l.b16 %v430
          %v719 = vunpack.c.l.b16 %v431
          %v720 = vunpack.c.l.b16 %v432
          %v721 = vunpack.c.l.b16 %v433
          %v722 = vunpack.c.l.b16 %v434
          %v723 = vunpack.c.l.b16 %v435
          %v724 = vunpack.c.l.b16 %v436
          %v725 = vunpack.c.l.b16 %v437
          %v726 = vunpack.c.l.b16 %v438
          %v727 = vunpack.c.l.b16 %v439
          %v728 = vunpack.c.l.b16 %v440
          %v729 = vunpack.c.l.b16 %v441
          %v730 = vunpack.c.l.b16 %v442
          %v731 = vunpack.c.l.b16 %v443
          %v732 = vunpack.c.l.b16 %v444
          %v733 = vunpack.c.l.b16 %v445
          %v734 = vunpack.c.l.b16 %v446
          %v735 = vunpack.c.l.b16 %v447
          %v736 = vunpack.c.l.b16 %v448
          %v737 = vunpack.c.l.b16 %v449
          %v738 = vunpack.c.l.b16 %v450
          %v739 = vpack.c.b16 %v708, %v707
          %v740 = vpack.c.b16 %v710, %v709
          %v741 = vpack.c.b16 %v712, %v711
          %v742 = vpack.c.b16 %v714, %v713
          %v743 = vpack.c.b16 %v716, %v715
          %v744 = vpack.c.b16 %v718, %v717
          %v745 = vpack.c.b16 %v720, %v719
          %v746 = vpack.c.b16 %v722, %v721
          %v747 = vpack.c.b16 %v724, %v723
          %v748 = vpack.c.b16 %v726, %v725
          %v749 = vpack.c.b16 %v728, %v727
          %v750 = vpack.c.b16 %v730, %v729
          %v751 = vpack.c.b16 %v732, %v731
          %v752 = vpack.c.b16 %v734, %v733
          %v753 = vpack.c.b16 %v736, %v735
          %v754 = vpack.c.b16 %v738, %v737
          %771 = vmatprep.subr.bf16.mxu0 0
          %772 = vmatpush1.bf16.msra.mxu0 %v739
          %773 = vmatprep.subr.bf16.mxu0 0
          %774 = vmatpush1.bf16.msra.mxu0 %v740
          %775 = vmatprep.subr.bf16.mxu0 0
          %776 = vmatpush1.bf16.msra.mxu0 %v741
          %777 = vmatprep.subr.bf16.mxu0 0
          %778 = vmatpush1.bf16.msra.mxu0 %v742
          %779 = vmatprep.subr.bf16.mxu0 0
          %780 = vmatpush1.bf16.msra.mxu0 %v743
          %781 = vmatprep.subr.bf16.mxu0 0
          %782 = vmatpush1.bf16.msra.mxu0 %v744
          %783 = vmatprep.subr.bf16.mxu0 0
          %784 = vmatpush1.bf16.msra.mxu0 %v745
          %785 = vmatprep.subr.bf16.mxu0 0
          %786 = vmatpush1.bf16.msra.mxu0 %v746
          %787 = vmatprep.subr.bf16.mxu0 0
          %788 = vmatpush1.bf16.msra.mxu0 %v747
          %789 = vmatprep.subr.bf16.mxu0 0
          %790 = vmatpush1.bf16.msra.mxu0 %v748
          %791 = vmatprep.subr.bf16.mxu0 0
          %792 = vmatpush1.bf16.msra.mxu0 %v749
          %793 = vmatprep.subr.bf16.mxu0 0
          %794 = vmatpush1.bf16.msra.mxu0 %v750
          %795 = vmatprep.subr.bf16.mxu0 0
          %796 = vmatpush1.bf16.msra.mxu0 %v751
          %797 = vmatprep.subr.bf16.mxu0 0
          %798 = vmatpush1.bf16.msra.mxu0 %v752
          %799 = vmatprep.subr.bf16.mxu0 0
          %800 = vmatpush1.bf16.msra.mxu0 %v753
          %801 = vmatprep.subr.bf16.mxu0 0
          %802 = vmatpush1.bf16.msra.mxu0 %v754
          %803 = vmatprep.mubr.bf16.mxu0 %v612
          %804 = vmatmul.mubr.bf16.gmra.mrb[0].mxu0 %v611
          %v805 = vpop.f32.mrb[0].mxu0
          %v806 = vadd.f32 0.0, %v805
          %v807 = vpop.f32.mrb[0].mxu0
          %v808 = vpop.f32.mrb[0].mxu0
          %v809 = vadd.f32 0.0, %v808
          %v810 = vpop.f32.mrb[0].mxu0
          %811 = vmatprep.mubr.bf16.mxu0 %v614
          %812 = vmatmul.mubr.bf16.gmra.mrb[0].mxu0 %v613
          %v813 = vpop.f32.mrb[0].mxu0
          %v814 = vadd.f32 0.0, %v813
          %v815 = vpop.f32.mrb[0].mxu0
          %v816 = vpop.f32.mrb[0].mxu0
          %v817 = vadd.f32 0.0, %v816
          %v818 = vpop.f32.mrb[0].mxu0
          %819 = vmatprep.mubr.bf16.mxu0 %v616
          %820 = vmatmul.mubr.bf16.gmra.mrb[0].mxu0 %v615
          %v821 = vpop.f32.mrb[0].mxu0
          %v822 = vadd.f32 0.0, %v821
          %v823 = vpop.f32.mrb[0].mxu0
          %v824 = vpop.f32.mrb[0].mxu0
          %v825 = vadd.f32 0.0, %v824
          %v826 = vpop.f32.mrb[0].mxu0
          %827 = vmatprep.mubr.bf16.mxu0 %v618
          %828 = vmatmul.mubr.bf16.gmra.mrb[0].mxu0 %v617
          %v829 = vpop.f32.mrb[0].mxu0
          %v830 = vadd.f32 0.0, %v829
          %v831 = vpop.f32.mrb[0].mxu0
          %v832 = vpop.f32.mrb[0].mxu0
          %v833 = vadd.f32 0.0, %v832
          %v834 = vpop.f32.mrb[0].mxu0
          %835 = vmatprep.mubr.bf16.mxu0 %v620
          %836 = vmatmul.mubr.bf16.gmra.mrb[0].mxu0 %v619
          %v837 = vpop.f32.mrb[0].mxu0
          %v838 = vadd.f32 0.0, %v837
          %v839 = vpop.f32.mrb[0].mxu0
          %v840 = vpop.f32.mrb[0].mxu0
          %v841 = vadd.f32 0.0, %v840
          %v842 = vpop.f32.mrb[0].mxu0
          %843 = vmatprep.mubr.bf16.mxu0 %v622
          %844 = vmatmul.mubr.bf16.gmra.mrb[0].mxu0 %v621
          %v845 = vpop.f32.mrb[0].mxu0
          %v846 = vadd.f32 0.0, %v845
          %v847 = vpop.f32.mrb[0].mxu0
          %v848 = vpop.f32.mrb[0].mxu0
          %v849 = vadd.f32 0.0, %v848
          %v850 = vpop.f32.mrb[0].mxu0
          %851 = vmatprep.mubr.bf16.mxu0 %v624
          %852 = vmatmul.mubr.bf16.gmra.mrb[0].mxu0 %v623
          %v853 = vpop.f32.mrb[0].mxu0
          %v854 = vadd.f32 0.0, %v853
          %v855 = vpop.f32.mrb[0].mxu0
          %v856 = vpop.f32.mrb[0].mxu0
          %v857 = vadd.f32 0.0, %v856
          %v858 = vpop.f32.mrb[0].mxu0
          %859 = vmatprep.mubr.bf16.mxu0 %v626
          %860 = vmatmul.mubr.bf16.gmra.mrb[0].mxu0 %v625
          %v861 = vpop.f32.mrb[0].mxu0
          %v862 = vadd.f32 0.0, %v861
          %v863 = vpop.f32.mrb[0].mxu0
          %v864 = vpop.f32.mrb[0].mxu0
          %v865 = vadd.f32 0.0, %v864
          %v866 = vpop.f32.mrb[0].mxu0
          %867 = vmatprep.mubr.bf16.mxu0 %v628
          %868 = vmatmul.mubr.bf16.gmra.mrb[0].mxu0 %v627
          %v869 = vpop.f32.mrb[0].mxu0
          %v870 = vadd.f32 0.0, %v869
          %v871 = vpop.f32.mrb[0].mxu0
          %v872 = vpop.f32.mrb[0].mxu0
          %v873 = vadd.f32 0.0, %v872
          %v874 = vpop.f32.mrb[0].mxu0
          %875 = vmatprep.mubr.bf16.mxu0 %v630
          %876 = vmatmul.mubr.bf16.gmra.mrb[0].mxu0 %v629
          %v877 = vpop.f32.mrb[0].mxu0
          %v878 = vadd.f32 0.0, %v877
          %v879 = vpop.f32.mrb[0].mxu0
          %v880 = vpop.f32.mrb[0].mxu0
          %v881 = vadd.f32 0.0, %v880
          %v882 = vpop.f32.mrb[0].mxu0
          %883 = vmatprep.mubr.bf16.mxu0 %v632
          %884 = vmatmul.mubr.bf16.gmra.mrb[0].mxu0 %v631
          %v885 = vpop.f32.mrb[0].mxu0
          %v886 = vadd.f32 0.0, %v885
          %v887 = vpop.f32.mrb[0].mxu0
          %v888 = vpop.f32.mrb[0].mxu0
          %v889 = vadd.f32 0.0, %v888
          %v890 = vpop.f32.mrb[0].mxu0
          %891 = vmatprep.mubr.bf16.mxu0 %v634
          %892 = vmatmul.mubr.bf16.gmra.mrb[0].mxu0 %v633
          %v893 = vpop.f32.mrb[0].mxu0
          %v894 = vadd.f32 0.0, %v893
          %v895 = vpop.f32.mrb[0].mxu0
          %v896 = vpop.f32.mrb[0].mxu0
          %v897 = vadd.f32 0.0, %v896
          %v898 = vpop.f32.mrb[0].mxu0
          %899 = vmatprep.mubr.bf16.mxu0 %v636
          %900 = vmatmul.mubr.bf16.gmra.mrb[0].mxu0 %v635
          %v901 = vpop.f32.mrb[0].mxu0
          %v902 = vadd.f32 0.0, %v901
          %v903 = vpop.f32.mrb[0].mxu0
          %v904 = vpop.f32.mrb[0].mxu0
          %v905 = vadd.f32 0.0, %v904
          %v906 = vpop.f32.mrb[0].mxu0
          %907 = vmatprep.mubr.bf16.mxu0 %v638
          %908 = vmatmul.mubr.bf16.gmra.mrb[0].mxu0 %v637
          %v909 = vpop.f32.mrb[0].mxu0
          %v910 = vadd.f32 0.0, %v909
          %v911 = vpop.f32.mrb[0].mxu0
          %v912 = vpop.f32.mrb[0].mxu0
          %v913 = vadd.f32 0.0, %v912
          %v914 = vpop.f32.mrb[0].mxu0
          %915 = vmatprep.mubr.bf16.mxu0 %v640
          %916 = vmatmul.mubr.bf16.gmra.mrb[0].mxu0 %v639
          %v917 = vpop.f32.mrb[0].mxu0
          %v918 = vadd.f32 0.0, %v917
          %v919 = vpop.f32.mrb[0].mxu0
          %v920 = vpop.f32.mrb[0].mxu0
          %v921 = vadd.f32 0.0, %v920
          %v922 = vpop.f32.mrb[0].mxu0
          %923 = vmatprep.mubr.bf16.mxu0 %v642
          %924 = vmatmul.mubr.bf16.gmra.mrb[0].mxu0 %v641
          %v925 = vpop.f32.mrb[0].mxu0
          %v926 = vadd.f32 0.0, %v925
          %v927 = vpop.f32.mrb[0].mxu0
          %v928 = vpop.f32.mrb[0].mxu0
          %v929 = vadd.f32 0.0, %v928
          %v930 = vpop.f32.mrb[0].mxu0
          %931 = vdwg.mxu0
          %v932 = vadd.f32 %v451, %v806
          %v933 = vadd.f32 %v452, %v809
          %v934 = vadd.f32 %v453, %v814
          %v935 = vadd.f32 %v454, %v817
          %v936 = vadd.f32 %v455, %v822
          %v937 = vadd.f32 %v456, %v825
          %v938 = vadd.f32 %v457, %v830
          %v939 = vadd.f32 %v458, %v833
          %v940 = vadd.f32 %v459, %v838
          %v941 = vadd.f32 %v460, %v841
          %v942 = vadd.f32 %v461, %v846
          %v943 = vadd.f32 %v462, %v849
          %v944 = vadd.f32 %v463, %v854
          %v945 = vadd.f32 %v464, %v857
          %v946 = vadd.f32 %v465, %v862
          %v947 = vadd.f32 %v466, %v865
          %v948 = vadd.f32 %v467, %v870
          %v949 = vadd.f32 %v468, %v873
          %v950 = vadd.f32 %v469, %v878
          %v951 = vadd.f32 %v470, %v881
          %v952 = vadd.f32 %v471, %v886
          %v953 = vadd.f32 %v472, %v889
          %v954 = vadd.f32 %v473, %v894
          %v955 = vadd.f32 %v474, %v897
          %v956 = vadd.f32 %v475, %v902
          %v957 = vadd.f32 %v476, %v905
          %v958 = vadd.f32 %v477, %v910
          %v959 = vadd.f32 %v478, %v913
          %v960 = vadd.f32 %v479, %v918
          %v961 = vadd.f32 %v480, %v921
          %v962 = vadd.f32 %v481, %v926
          %v963 = vadd.f32 %v482, %v929
          %964 = vst [vmem:[#allocation2] sm:$0xff] %v932
          %965 = vst [vmem:[#allocation2 + $0x8] sm:$0xff] %v933
          %966 = vst [vmem:[#allocation2 + $0x10] sm:$0xff] %v934
          %967 = vst [vmem:[#allocation2 + $0x18] sm:$0xff] %v935
          %968 = vst [vmem:[#allocation2 + $0x20] sm:$0xff] %v936
          %969 = vst [vmem:[#allocation2 + $0x28] sm:$0xff] %v937
          %970 = vst [vmem:[#allocation2 + $0x30] sm:$0xff] %v938
          %971 = vst [vmem:[#allocation2 + $0x38] sm:$0xff] %v939
          %972 = vst [vmem:[#allocation2 + $0x40] sm:$0xff] %v940
          %973 = vst [vmem:[#allocation2 + $0x48] sm:$0xff] %v941
          %974 = vst [vmem:[#allocation2 + $0x50] sm:$0xff] %v942
          %975 = vst [vmem:[#allocation2 + $0x58] sm:$0xff] %v943
          %976 = vst [vmem:[#allocation2 + $0x60] sm:$0xff] %v944
          %977 = vst [vmem:[#allocation2 + $0x68] sm:$0xff] %v945
          %978 = vst [vmem:[#allocation2 + $0x70] sm:$0xff] %v946
          %979 = vst [vmem:[#allocation2 + $0x78] sm:$0xff] %v947
          %980 = vst [vmem:[#allocation2 + $0x80] sm:$0xff] %v948
          %981 = vst [vmem:[#allocation2 + $0x88] sm:$0xff] %v949
          %982 = vst [vmem:[#allocation2 + $0x90] sm:$0xff] %v950
          %983 = vst [vmem:[#allocation2 + $0x98] sm:$0xff] %v951
          %984 = vst [vmem:[#allocation2 + $0xa0] sm:$0xff] %v952
          %985 = vst [vmem:[#allocation2 + $0xa8] sm:$0xff] %v953
          %986 = vst [vmem:[#allocation2 + $0xb0] sm:$0xff] %v954
          %987 = vst [vmem:[#allocation2 + $0xb8] sm:$0xff] %v955
          %988 = vst [vmem:[#allocation2 + $0xc0] sm:$0xff] %v956
          %989 = vst [vmem:[#allocation2 + $0xc8] sm:$0xff] %v957
          %990 = vst [vmem:[#allocation2 + $0xd0] sm:$0xff] %v958
          %991 = vst [vmem:[#allocation2 + $0xd8] sm:$0xff] %v959
          %992 = vst [vmem:[#allocation2 + $0xe0] sm:$0xff] %v960
          %993 = vst [vmem:[#allocation2 + $0xe8] sm:$0xff] %v961
          %994 = vst [vmem:[#allocation2 + $0xf0] sm:$0xff] %v962
          %995 = vst [vmem:[#allocation2 + $0xf8] sm:$0xff] %v963
        $region64: #{tpu_custom_call.1} parent=39 // pred_fallthru
          _
        %p996 = scmp.eq.s32.totalorder %s37, 2
        // Predicated region
        $region65: #{tpu_custom_call.1} parent=39 // pred_check
          %p997 = pneg %p996
        $region66: #{tpu_custom_call.1} parent=39 // pred_check_branch
          %999 = sbr.rel (%p997) target = $region68
        $region67: #{tpu_custom_call.1} parent=39 // pred_region
          %v1000 = vld [vmem:[%s361] sm:$0xff]
          %v1001 = vld [vmem:[%s361 + $0x8] sm:$0xff]
          %v1002 = vld [vmem:[%s361 + $0x10] sm:$0xff]
          %v1003 = vld [vmem:[%s361 + $0x18] sm:$0xff]
          %v1004 = vld [vmem:[%s361 + $0x20] sm:$0xff]
          %v1005 = vld [vmem:[%s361 + $0x28] sm:$0xff]
          %v1006 = vld [vmem:[%s361 + $0x30] sm:$0xff]
          %v1007 = vld [vmem:[%s361 + $0x38] sm:$0xff]
          %v1008 = vld [vmem:[%s361 + $0x40] sm:$0xff]
          %v1009 = vld [vmem:[%s361 + $0x48] sm:$0xff]
          %v1010 = vld [vmem:[%s361 + $0x50] sm:$0xff]
          %v1011 = vld [vmem:[%s361 + $0x58] sm:$0xff]
          %v1012 = vld [vmem:[%s361 + $0x60] sm:$0xff]
          %v1013 = vld [vmem:[%s361 + $0x68] sm:$0xff]
          %v1014 = vld [vmem:[%s361 + $0x70] sm:$0xff]
          %v1015 = vld [vmem:[%s361 + $0x78] sm:$0xff]
          %v1016 = vld [vmem:[%s361 + $0x80] sm:$0xff]
          %v1017 = vld [vmem:[%s361 + $0x88] sm:$0xff]
          %v1018 = vld [vmem:[%s361 + $0x90] sm:$0xff]
          %v1019 = vld [vmem:[%s361 + $0x98] sm:$0xff]
          %v1020 = vld [vmem:[%s361 + $0xa0] sm:$0xff]
          %v1021 = vld [vmem:[%s361 + $0xa8] sm:$0xff]
          %v1022 = vld [vmem:[%s361 + $0xb0] sm:$0xff]
          %v1023 = vld [vmem:[%s361 + $0xb8] sm:$0xff]
          %v1024 = vld [vmem:[%s361 + $0xc0] sm:$0xff]
          %v1025 = vld [vmem:[%s361 + $0xc8] sm:$0xff]
          %v1026 = vld [vmem:[%s361 + $0xd0] sm:$0xff]
          %v1027 = vld [vmem:[%s361 + $0xd8] sm:$0xff]
          %v1028 = vld [vmem:[%s361 + $0xe0] sm:$0xff]
          %v1029 = vld [vmem:[%s361 + $0xe8] sm:$0xff]
          %v1030 = vld [vmem:[%s361 + $0xf0] sm:$0xff]
          %v1031 = vld [vmem:[%s361 + $0xf8] sm:$0xff]
          %v1032 = vld [vmem:[#allocation2] sm:$0xff]
          %v1033 = vld [vmem:[#allocation2 + $0x8] sm:$0xff]
          %v1034 = vld [vmem:[#allocation2 + $0x10] sm:$0xff]
          %v1035 = vld [vmem:[#allocation2 + $0x18] sm:$0xff]
          %v1036 = vld [vmem:[#allocation2 + $0x20] sm:$0xff]
          %v1037 = vld [vmem:[#allocation2 + $0x28] sm:$0xff]
          %v1038 = vld [vmem:[#allocation2 + $0x30] sm:$0xff]
          %v1039 = vld [vmem:[#allocation2 + $0x38] sm:$0xff]
          %v1040 = vld [vmem:[#allocation2 + $0x40] sm:$0xff]
          %v1041 = vld [vmem:[#allocation2 + $0x48] sm:$0xff]
          %v1042 = vld [vmem:[#allocation2 + $0x50] sm:$0xff]
          %v1043 = vld [vmem:[#allocation2 + $0x58] sm:$0xff]
          %v1044 = vld [vmem:[#allocation2 + $0x60] sm:$0xff]
          %v1045 = vld [vmem:[#allocation2 + $0x68] sm:$0xff]
          %v1046 = vld [vmem:[#allocation2 + $0x70] sm:$0xff]
          %v1047 = vld [vmem:[#allocation2 + $0x78] sm:$0xff]
          %v1048 = vld [vmem:[#allocation2 + $0x80] sm:$0xff]
          %v1049 = vld [vmem:[#allocation2 + $0x88] sm:$0xff]
          %v1050 = vld [vmem:[#allocation2 + $0x90] sm:$0xff]
          %v1051 = vld [vmem:[#allocation2 + $0x98] sm:$0xff]
          %v1052 = vld [vmem:[#allocation2 + $0xa0] sm:$0xff]
          %v1053 = vld [vmem:[#allocation2 + $0xa8] sm:$0xff]
          %v1054 = vld [vmem:[#allocation2 + $0xb0] sm:$0xff]
          %v1055 = vld [vmem:[#allocation2 + $0xb8] sm:$0xff]
          %v1056 = vld [vmem:[#allocation2 + $0xc0] sm:$0xff]
          %v1057 = vld [vmem:[#allocation2 + $0xc8] sm:$0xff]
          %v1058 = vld [vmem:[#allocation2 + $0xd0] sm:$0xff]
          %v1059 = vld [vmem:[#allocation2 + $0xd8] sm:$0xff]
          %v1060 = vld [vmem:[#allocation2 + $0xe0] sm:$0xff]
          %v1061 = vld [vmem:[#allocation2 + $0xe8] sm:$0xff]
          %v1062 = vld [vmem:[#allocation2 + $0xf0] sm:$0xff]
          %v1063 = vld [vmem:[#allocation2 + $0xf8] sm:$0xff]
          %1065 = vset.pattern.permute.xlu0 0
          %1066 = vperm.xlu0 %1065, %v1000
          %v1067 = vpop.permute.xlu0 %1066
          %1070 = vset.pattern.permute.xlu0 0
          %1071 = vperm.xlu0 %1070, %v1001
          %v1072 = vpop.permute.xlu0 %1071
          %1075 = vset.pattern.permute.xlu0 0
          %1076 = vperm.xlu0 %1075, %v1002
          %v1077 = vpop.permute.xlu0 %1076
          %1080 = vset.pattern.permute.xlu0 0
          %1081 = vperm.xlu0 %1080, %v1003
          %v1082 = vpop.permute.xlu0 %1081
          %1085 = vset.pattern.permute.xlu0 0
          %1086 = vperm.xlu0 %1085, %v1004
          %v1087 = vpop.permute.xlu0 %1086
          %1090 = vset.pattern.permute.xlu0 0
          %1091 = vperm.xlu0 %1090, %v1005
          %v1092 = vpop.permute.xlu0 %1091
          %1095 = vset.pattern.permute.xlu0 0
          %1096 = vperm.xlu0 %1095, %v1006
          %v1097 = vpop.permute.xlu0 %1096
          %1100 = vset.pattern.permute.xlu0 0
          %1101 = vperm.xlu0 %1100, %v1007
          %v1102 = vpop.permute.xlu0 %1101
          %1105 = vset.pattern.permute.xlu0 0
          %1106 = vperm.xlu0 %1105, %v1008
          %v1107 = vpop.permute.xlu0 %1106
          %1110 = vset.pattern.permute.xlu0 0
          %1111 = vperm.xlu0 %1110, %v1009
          %v1112 = vpop.permute.xlu0 %1111
          %1115 = vset.pattern.permute.xlu0 0
          %1116 = vperm.xlu0 %1115, %v1010
          %v1117 = vpop.permute.xlu0 %1116
          %1120 = vset.pattern.permute.xlu0 0
          %1121 = vperm.xlu0 %1120, %v1011
          %v1122 = vpop.permute.xlu0 %1121
          %1125 = vset.pattern.permute.xlu0 0
          %1126 = vperm.xlu0 %1125, %v1012
          %v1127 = vpop.permute.xlu0 %1126
          %1130 = vset.pattern.permute.xlu0 0
          %1131 = vperm.xlu0 %1130, %v1013
          %v1132 = vpop.permute.xlu0 %1131
          %1135 = vset.pattern.permute.xlu0 0
          %1136 = vperm.xlu0 %1135, %v1014
          %v1137 = vpop.permute.xlu0 %1136
          %1140 = vset.pattern.permute.xlu0 0
          %1141 = vperm.xlu0 %1140, %v1015
          %v1142 = vpop.permute.xlu0 %1141
          %1145 = vset.pattern.permute.xlu0 0
          %1146 = vperm.xlu0 %1145, %v1016
          %v1147 = vpop.permute.xlu0 %1146
          %1150 = vset.pattern.permute.xlu0 0
          %1151 = vperm.xlu0 %1150, %v1017
          %v1152 = vpop.permute.xlu0 %1151
          %1155 = vset.pattern.permute.xlu0 0
          %1156 = vperm.xlu0 %1155, %v1018
          %v1157 = vpop.permute.xlu0 %1156
          %1160 = vset.pattern.permute.xlu0 0
          %1161 = vperm.xlu0 %1160, %v1019
          %v1162 = vpop.permute.xlu0 %1161
          %1165 = vset.pattern.permute.xlu0 0
          %1166 = vperm.xlu0 %1165, %v1020
          %v1167 = vpop.permute.xlu0 %1166
          %1170 = vset.pattern.permute.xlu0 0
          %1171 = vperm.xlu0 %1170, %v1021
          %v1172 = vpop.permute.xlu0 %1171
          %1175 = vset.pattern.permute.xlu0 0
          %1176 = vperm.xlu0 %1175, %v1022
          %v1177 = vpop.permute.xlu0 %1176
          %1180 = vset.pattern.permute.xlu0 0
          %1181 = vperm.xlu0 %1180, %v1023
          %v1182 = vpop.permute.xlu0 %1181
          %1185 = vset.pattern.permute.xlu0 0
          %1186 = vperm.xlu0 %1185, %v1024
          %v1187 = vpop.permute.xlu0 %1186
          %1190 = vset.pattern.permute.xlu0 0
          %1191 = vperm.xlu0 %1190, %v1025
          %v1192 = vpop.permute.xlu0 %1191
          %1195 = vset.pattern.permute.xlu0 0
          %1196 = vperm.xlu0 %1195, %v1026
          %v1197 = vpop.permute.xlu0 %1196
          %1200 = vset.pattern.permute.xlu0 0
          %1201 = vperm.xlu0 %1200, %v1027
          %v1202 = vpop.permute.xlu0 %1201
          %1205 = vset.pattern.permute.xlu0 0
          %1206 = vperm.xlu0 %1205, %v1028
          %v1207 = vpop.permute.xlu0 %1206
          %1210 = vset.pattern.permute.xlu0 0
          %1211 = vperm.xlu0 %1210, %v1029
          %v1212 = vpop.permute.xlu0 %1211
          %1215 = vset.pattern.permute.xlu0 0
          %1216 = vperm.xlu0 %1215, %v1030
          %v1217 = vpop.permute.xlu0 %1216
          %1220 = vset.pattern.permute.xlu0 0
          %1221 = vperm.xlu0 %1220, %v1031
          %v1222 = vpop.permute.xlu0 %1221
          %v1224 = vmul.f32 %v1067, %v1032
          %v1225 = vmul.f32 %v1072, %v1033
          %v1226 = vmul.f32 %v1077, %v1034
          %v1227 = vmul.f32 %v1082, %v1035
          %v1228 = vmul.f32 %v1087, %v1036
          %v1229 = vmul.f32 %v1092, %v1037
          %v1230 = vmul.f32 %v1097, %v1038
          %v1231 = vmul.f32 %v1102, %v1039
          %v1232 = vmul.f32 %v1107, %v1040
          %v1233 = vmul.f32 %v1112, %v1041
          %v1234 = vmul.f32 %v1117, %v1042
          %v1235 = vmul.f32 %v1122, %v1043
          %v1236 = vmul.f32 %v1127, %v1044
          %v1237 = vmul.f32 %v1132, %v1045
          %v1238 = vmul.f32 %v1137, %v1046
          %v1239 = vmul.f32 %v1142, %v1047
          %v1240 = vmul.f32 %v1147, %v1048
          %v1241 = vmul.f32 %v1152, %v1049
          %v1242 = vmul.f32 %v1157, %v1050
          %v1243 = vmul.f32 %v1162, %v1051
          %v1244 = vmul.f32 %v1167, %v1052
          %v1245 = vmul.f32 %v1172, %v1053
          %v1246 = vmul.f32 %v1177, %v1054
          %v1247 = vmul.f32 %v1182, %v1055
          %v1248 = vmul.f32 %v1187, %v1056
          %v1249 = vmul.f32 %v1192, %v1057
          %v1250 = vmul.f32 %v1197, %v1058
          %v1251 = vmul.f32 %v1202, %v1059
          %v1252 = vmul.f32 %v1207, %v1060
          %v1253 = vmul.f32 %v1212, %v1061
          %v1254 = vmul.f32 %v1217, %v1062
          %v1255 = vmul.f32 %v1222, %v1063
          %v1256 = vld [vmem:[#allocation11] sm:$0x1]
          %v1258 = vlaneseq
          %v1259 = vshrl.u32 %v1258, 7
          %v1260 = vsub.s32 0, %v1259
          %v1261 = vrot.slane %v1256, %v1260
          %v1263 = vadd.f32 %v1224, %v1261
          %v1264 = vadd.f32 %v1225, %v1261
          %v1265 = vadd.f32 %v1226, %v1261
          %v1266 = vadd.f32 %v1227, %v1261
          %v1267 = vadd.f32 %v1228, %v1261
          %v1268 = vadd.f32 %v1229, %v1261
          %v1269 = vadd.f32 %v1230, %v1261
          %v1270 = vadd.f32 %v1231, %v1261
          %v1271 = vadd.f32 %v1232, %v1261
          %v1272 = vadd.f32 %v1233, %v1261
          %v1273 = vadd.f32 %v1234, %v1261
          %v1274 = vadd.f32 %v1235, %v1261
          %v1275 = vadd.f32 %v1236, %v1261
          %v1276 = vadd.f32 %v1237, %v1261
          %v1277 = vadd.f32 %v1238, %v1261
          %v1278 = vadd.f32 %v1239, %v1261
          %v1279 = vadd.f32 %v1240, %v1261
          %v1280 = vadd.f32 %v1241, %v1261
          %v1281 = vadd.f32 %v1242, %v1261
          %v1282 = vadd.f32 %v1243, %v1261
          %v1283 = vadd.f32 %v1244, %v1261
          %v1284 = vadd.f32 %v1245, %v1261
          %v1285 = vadd.f32 %v1246, %v1261
          %v1286 = vadd.f32 %v1247, %v1261
          %v1287 = vadd.f32 %v1248, %v1261
          %v1288 = vadd.f32 %v1249, %v1261
          %v1289 = vadd.f32 %v1250, %v1261
          %v1290 = vadd.f32 %v1251, %v1261
          %v1291 = vadd.f32 %v1252, %v1261
          %v1292 = vadd.f32 %v1253, %v1261
          %v1293 = vadd.f32 %v1254, %v1261
          %v1294 = vadd.f32 %v1255, %v1261
          %v1295 = vmax.f32 %v1263, 0.0
          %v1296 = vmax.f32 %v1264, 0.0
          %v1297 = vmax.f32 %v1265, 0.0
          %v1298 = vmax.f32 %v1266, 0.0
          %v1299 = vmax.f32 %v1267, 0.0
          %v1300 = vmax.f32 %v1268, 0.0
          %v1301 = vmax.f32 %v1269, 0.0
          %v1302 = vmax.f32 %v1270, 0.0
          %v1303 = vmax.f32 %v1271, 0.0
          %v1304 = vmax.f32 %v1272, 0.0
          %v1305 = vmax.f32 %v1273, 0.0
          %v1306 = vmax.f32 %v1274, 0.0
          %v1307 = vmax.f32 %v1275, 0.0
          %v1308 = vmax.f32 %v1276, 0.0
          %v1309 = vmax.f32 %v1277, 0.0
          %v1310 = vmax.f32 %v1278, 0.0
          %v1311 = vmax.f32 %v1279, 0.0
          %v1312 = vmax.f32 %v1280, 0.0
          %v1313 = vmax.f32 %v1281, 0.0
          %v1314 = vmax.f32 %v1282, 0.0
          %v1315 = vmax.f32 %v1283, 0.0
          %v1316 = vmax.f32 %v1284, 0.0
          %v1317 = vmax.f32 %v1285, 0.0
          %v1318 = vmax.f32 %v1286, 0.0
          %v1319 = vmax.f32 %v1287, 0.0
          %v1320 = vmax.f32 %v1288, 0.0
          %v1321 = vmax.f32 %v1289, 0.0
          %v1322 = vmax.f32 %v1290, 0.0
          %v1323 = vmax.f32 %v1291, 0.0
          %v1324 = vmax.f32 %v1292, 0.0
          %v1325 = vmax.f32 %v1293, 0.0
          %v1326 = vmax.f32 %v1294, 0.0
          %v1327 = vmul.f32 %v1067, %v1295
          %v1328 = vmul.f32 %v1072, %v1296
          %v1329 = vmul.f32 %v1077, %v1297
          %v1330 = vmul.f32 %v1082, %v1298
          %v1331 = vmul.f32 %v1087, %v1299
          %v1332 = vmul.f32 %v1092, %v1300
          %v1333 = vmul.f32 %v1097, %v1301
          %v1334 = vmul.f32 %v1102, %v1302
          %v1335 = vmul.f32 %v1107, %v1303
          %v1336 = vmul.f32 %v1112, %v1304
          %v1337 = vmul.f32 %v1117, %v1305
          %v1338 = vmul.f32 %v1122, %v1306
          %v1339 = vmul.f32 %v1127, %v1307
          %v1340 = vmul.f32 %v1132, %v1308
          %v1341 = vmul.f32 %v1137, %v1309
          %v1342 = vmul.f32 %v1142, %v1310
          %v1343 = vmul.f32 %v1147, %v1311
          %v1344 = vmul.f32 %v1152, %v1312
          %v1345 = vmul.f32 %v1157, %v1313
          %v1346 = vmul.f32 %v1162, %v1314
          %v1347 = vmul.f32 %v1167, %v1315
          %v1348 = vmul.f32 %v1172, %v1316
          %v1349 = vmul.f32 %v1177, %v1317
          %v1350 = vmul.f32 %v1182, %v1318
          %v1351 = vmul.f32 %v1187, %v1319
          %v1352 = vmul.f32 %v1192, %v1320
          %v1353 = vmul.f32 %v1197, %v1321
          %v1354 = vmul.f32 %v1202, %v1322
          %v1355 = vmul.f32 %v1207, %v1323
          %v1356 = vmul.f32 %v1212, %v1324
          %v1357 = vmul.f32 %v1217, %v1325
          %v1358 = vmul.f32 %v1222, %v1326
          %v1359 = vpack.c.bf16 %v1328, %v1327
          %v1360 = vpack.c.bf16 %v1330, %v1329
          %v1361 = vpack.c.bf16 %v1332, %v1331
          %v1362 = vpack.c.bf16 %v1334, %v1333
          %v1363 = vpack.c.bf16 %v1336, %v1335
          %v1364 = vpack.c.bf16 %v1338, %v1337
          %v1365 = vpack.c.bf16 %v1340, %v1339
          %v1366 = vpack.c.bf16 %v1342, %v1341
          %v1367 = vpack.c.bf16 %v1344, %v1343
          %v1368 = vpack.c.bf16 %v1346, %v1345
          %v1369 = vpack.c.bf16 %v1348, %v1347
          %v1370 = vpack.c.bf16 %v1350, %v1349
          %v1371 = vpack.c.bf16 %v1352, %v1351
          %v1372 = vpack.c.bf16 %v1354, %v1353
          %v1373 = vpack.c.bf16 %v1356, %v1355
          %v1374 = vpack.c.bf16 %v1358, %v1357
          %v1375 = vld [vmem:[#allocation12] sm:$0xf]
          %v1376 = vld [vmem:[#allocation12 + $0x4] sm:$0xf]
          %v1377 = vld [vmem:[#allocation12 + $0x8] sm:$0xf]
          %v1378 = vld [vmem:[#allocation12 + $0xc] sm:$0xf]
          %v1379 = vld [vmem:[#allocation12 + $0x10] sm:$0xf]
          %v1380 = vld [vmem:[#allocation12 + $0x14] sm:$0xf]
          %v1381 = vld [vmem:[#allocation12 + $0x18] sm:$0xf]
          %v1382 = vld [vmem:[#allocation12 + $0x1c] sm:$0xf]
          %v1383 = vld [vmem:[#allocation12 + $0x20] sm:$0xf]
          %v1384 = vld [vmem:[#allocation12 + $0x24] sm:$0xf]
          %v1385 = vld [vmem:[#allocation12 + $0x28] sm:$0xf]
          %v1386 = vld [vmem:[#allocation12 + $0x2c] sm:$0xf]
          %v1387 = vld [vmem:[#allocation12 + $0x30] sm:$0xf]
          %v1388 = vld [vmem:[#allocation12 + $0x34] sm:$0xf]
          %v1389 = vld [vmem:[#allocation12 + $0x38] sm:$0xf]
          %v1390 = vld [vmem:[#allocation12 + $0x3c] sm:$0xf]
          %v1407 = vunpack.c.l.b16 %v1375
          %v1408 = vunpack.c.l.b16 %v1376
          %v1409 = vunpack.c.l.b16 %v1377
          %v1410 = vunpack.c.l.b16 %v1378
          %v1411 = vunpack.c.l.b16 %v1379
          %v1412 = vunpack.c.l.b16 %v1380
          %v1413 = vunpack.c.l.b16 %v1381
          %v1414 = vunpack.c.l.b16 %v1382
          %v1415 = vunpack.c.l.b16 %v1383
          %v1416 = vunpack.c.l.b16 %v1384
          %v1417 = vunpack.c.l.b16 %v1385
          %v1418 = vunpack.c.l.b16 %v1386
          %v1419 = vunpack.c.l.b16 %v1387
          %v1420 = vunpack.c.l.b16 %v1388
          %v1421 = vunpack.c.l.b16 %v1389
          %v1422 = vunpack.c.l.b16 %v1390
          %v1423 = vpack.c.b16 %v1408, %v1407
          %v1424 = vpack.c.b16 %v1410, %v1409
          %v1425 = vpack.c.b16 %v1412, %v1411
          %v1426 = vpack.c.b16 %v1414, %v1413
          %v1427 = vpack.c.b16 %v1416, %v1415
          %v1428 = vpack.c.b16 %v1418, %v1417
          %v1429 = vpack.c.b16 %v1420, %v1419
          %v1430 = vpack.c.b16 %v1422, %v1421
          %1439 = vmatprep.subr.bf16.mxu0 0
          %1440 = vmatpush1.bf16.msra.mxu0 %v1423
          %1441 = vmatprep.subr.bf16.mxu0 0
          %1442 = vmatpush1.bf16.msra.mxu0 %v1424
          %1443 = vmatprep.subr.bf16.mxu0 0
          %1444 = vmatpush1.bf16.msra.mxu0 %v1425
          %1445 = vmatprep.subr.bf16.mxu0 0
          %1446 = vmatpush1.bf16.msra.mxu0 %v1426
          %1447 = vmatprep.subr.bf16.mxu0 0
          %1448 = vmatpush1.bf16.msra.mxu0 %v1427
          %1449 = vmatprep.subr.bf16.mxu0 0
          %1450 = vmatpush1.bf16.msra.mxu0 %v1428
          %1451 = vmatprep.subr.bf16.mxu0 0
          %1452 = vmatpush1.bf16.msra.mxu0 %v1429
          %1453 = vmatprep.subr.bf16.mxu0 0
          %1454 = vmatpush1.bf16.msra.mxu0 %v1430
          %1455 = vmatprep.subr.bf16.mxu0 0
          %1456 = vmatpush1.bf16.msra.mxu0 0
          %1457 = vmatprep.subr.bf16.mxu0 0
          %1458 = vmatpush1.bf16.msra.mxu0 0
          %1459 = vmatprep.subr.bf16.mxu0 0
          %1460 = vmatpush1.bf16.msra.mxu0 0
          %1461 = vmatprep.subr.bf16.mxu0 0
          %1462 = vmatpush1.bf16.msra.mxu0 0
          %1463 = vmatprep.subr.bf16.mxu0 0
          %1464 = vmatpush1.bf16.msra.mxu0 0
          %1465 = vmatprep.subr.bf16.mxu0 0
          %1466 = vmatpush1.bf16.msra.mxu0 0
          %1467 = vmatprep.subr.bf16.mxu0 0
          %1468 = vmatpush1.bf16.msra.mxu0 0
          %1469 = vmatprep.subr.bf16.mxu0 0
          %1470 = vmatpush1.bf16.msra.mxu0 0
          %1471 = vmatprep.mubr.bf16.mxu0 0
          %1472 = vmatmul.mubr.bf16.gmra.mrb[0].mxu0 %v1359
          %v1473 = vpop.f32.mrb[0].mxu0
          %v1474 = vadd.f32 0.0, %v1473
          %v1475 = vpop.f32.mrb[0].mxu0
          %v1476 = vpop.f32.mrb[0].mxu0
          %v1477 = vadd.f32 0.0, %v1476
          %v1478 = vpop.f32.mrb[0].mxu0
          %1479 = vmatprep.mubr.bf16.mxu0 0
          %1480 = vmatmul.mubr.bf16.gmra.mrb[0].mxu0 %v1360
          %v1481 = vpop.f32.mrb[0].mxu0
          %v1482 = vadd.f32 0.0, %v1481
          %v1483 = vpop.f32.mrb[0].mxu0
          %v1484 = vpop.f32.mrb[0].mxu0
          %v1485 = vadd.f32 0.0, %v1484
          %v1486 = vpop.f32.mrb[0].mxu0
          %1487 = vmatprep.mubr.bf16.mxu0 0
          %1488 = vmatmul.mubr.bf16.gmra.mrb[0].mxu0 %v1361
          %v1489 = vpop.f32.mrb[0].mxu0
          %v1490 = vadd.f32 0.0, %v1489
          %v1491 = vpop.f32.mrb[0].mxu0
          %v1492 = vpop.f32.mrb[0].mxu0
          %v1493 = vadd.f32 0.0, %v1492
          %v1494 = vpop.f32.mrb[0].mxu0
          %1495 = vmatprep.mubr.bf16.mxu0 0
          %1496 = vmatmul.mubr.bf16.gmra.mrb[0].mxu0 %v1362
          %v1497 = vpop.f32.mrb[0].mxu0
          %v1498 = vadd.f32 0.0, %v1497
          %v1499 = vpop.f32.mrb[0].mxu0
          %v1500 = vpop.f32.mrb[0].mxu0
          %v1501 = vadd.f32 0.0, %v1500
          %v1502 = vpop.f32.mrb[0].mxu0
          %1503 = vmatprep.mubr.bf16.mxu0 0
          %1504 = vmatmul.mubr.bf16.gmra.mrb[0].mxu0 %v1363
          %v1505 = vpop.f32.mrb[0].mxu0
          %v1506 = vadd.f32 0.0, %v1505
          %v1507 = vpop.f32.mrb[0].mxu0
          %v1508 = vpop.f32.mrb[0].mxu0
          %v1509 = vadd.f32 0.0, %v1508
          %v1510 = vpop.f32.mrb[0].mxu0
          %1511 = vmatprep.mubr.bf16.mxu0 0
          %1512 = vmatmul.mubr.bf16.gmra.mrb[0].mxu0 %v1364
          %v1513 = vpop.f32.mrb[0].mxu0
          %v1514 = vadd.f32 0.0, %v1513
          %v1515 = vpop.f32.mrb[0].mxu0
          %v1516 = vpop.f32.mrb[0].mxu0
          %v1517 = vadd.f32 0.0, %v1516
          %v1518 = vpop.f32.mrb[0].mxu0
          %1519 = vmatprep.mubr.bf16.mxu0 0
          %1520 = vmatmul.mubr.bf16.gmra.mrb[0].mxu0 %v1365
          %v1521 = vpop.f32.mrb[0].mxu0
          %v1522 = vadd.f32 0.0, %v1521
          %v1523 = vpop.f32.mrb[0].mxu0
          %v1524 = vpop.f32.mrb[0].mxu0
          %v1525 = vadd.f32 0.0, %v1524
          %v1526 = vpop.f32.mrb[0].mxu0
          %1527 = vmatprep.mubr.bf16.mxu0 0
          %1528 = vmatmul.mubr.bf16.gmra.mrb[0].mxu0 %v1366
          %v1529 = vpop.f32.mrb[0].mxu0
          %v1530 = vadd.f32 0.0, %v1529
          %v1531 = vpop.f32.mrb[0].mxu0
          %v1532 = vpop.f32.mrb[0].mxu0
          %v1533 = vadd.f32 0.0, %v1532
          %v1534 = vpop.f32.mrb[0].mxu0
          %1535 = vmatprep.mubr.bf16.mxu0 0
          %1536 = vmatmul.mubr.bf16.gmra.mrb[0].mxu0 %v1367
          %v1537 = vpop.f32.mrb[0].mxu0
          %v1538 = vadd.f32 0.0, %v1537
          %v1539 = vpop.f32.mrb[0].mxu0
          %v1540 = vpop.f32.mrb[0].mxu0
          %v1541 = vadd.f32 0.0, %v1540
          %v1542 = vpop.f32.mrb[0].mxu0
          %1543 = vmatprep.mubr.bf16.mxu0 0
          %1544 = vmatmul.mubr.bf16.gmra.mrb[0].mxu0 %v1368
          %v1545 = vpop.f32.mrb[0].mxu0
          %v1546 = vadd.f32 0.0, %v1545
          %v1547 = vpop.f32.mrb[0].mxu0
          %v1548 = vpop.f32.mrb[0].mxu0
          %v1549 = vadd.f32 0.0, %v1548
          %v1550 = vpop.f32.mrb[0].mxu0
          %1551 = vmatprep.mubr.bf16.mxu0 0
          %1552 = vmatmul.mubr.bf16.gmra.mrb[0].mxu0 %v1369
          %v1553 = vpop.f32.mrb[0].mxu0
          %v1554 = vadd.f32 0.0, %v1553
          %v1555 = vpop.f32.mrb[0].mxu0
          %v1556 = vpop.f32.mrb[0].mxu0
          %v1557 = vadd.f32 0.0, %v1556
          %v1558 = vpop.f32.mrb[0].mxu0
          %1559 = vmatprep.mubr.bf16.mxu0 0
          %1560 = vmatmul.mubr.bf16.gmra.mrb[0].mxu0 %v1370
          %v1561 = vpop.f32.mrb[0].mxu0
          %v1562 = vadd.f32 0.0, %v1561
          %v1563 = vpop.f32.mrb[0].mxu0
          %v1564 = vpop.f32.mrb[0].mxu0
          %v1565 = vadd.f32 0.0, %v1564
          %v1566 = vpop.f32.mrb[0].mxu0
          %1567 = vmatprep.mubr.bf16.mxu0 0
          %1568 = vmatmul.mubr.bf16.gmra.mrb[0].mxu0 %v1371
          %v1569 = vpop.f32.mrb[0].mxu0
          %v1570 = vadd.f32 0.0, %v1569
          %v1571 = vpop.f32.mrb[0].mxu0
          %v1572 = vpop.f32.mrb[0].mxu0
          %v1573 = vadd.f32 0.0, %v1572
          %v1574 = vpop.f32.mrb[0].mxu0
          %1575 = vmatprep.mubr.bf16.mxu0 0
          %1576 = vmatmul.mubr.bf16.gmra.mrb[0].mxu0 %v1372
          %v1577 = vpop.f32.mrb[0].mxu0
          %v1578 = vadd.f32 0.0, %v1577
          %v1579 = vpop.f32.mrb[0].mxu0
          %v1580 = vpop.f32.mrb[0].mxu0
          %v1581 = vadd.f32 0.0, %v1580
          %v1582 = vpop.f32.mrb[0].mxu0
          %1583 = vmatprep.mubr.bf16.mxu0 0
          %1584 = vmatmul.mubr.bf16.gmra.mrb[0].mxu0 %v1373
          %v1585 = vpop.f32.mrb[0].mxu0
          %v1586 = vadd.f32 0.0, %v1585
          %v1587 = vpop.f32.mrb[0].mxu0
          %v1588 = vpop.f32.mrb[0].mxu0
          %v1589 = vadd.f32 0.0, %v1588
          %v1590 = vpop.f32.mrb[0].mxu0
          %1591 = vmatprep.mubr.bf16.mxu0 0
          %1592 = vmatmul.mubr.bf16.gmra.mrb[0].mxu0 %v1374
          %v1593 = vpop.f32.mrb[0].mxu0
          %v1594 = vadd.f32 0.0, %v1593
          %v1595 = vpop.f32.mrb[0].mxu0
          %v1596 = vpop.f32.mrb[0].mxu0
          %v1597 = vadd.f32 0.0, %v1596
          %v1598 = vpop.f32.mrb[0].mxu0
          %1599 = vdwg.mxu0
          %v1600 = vpack.c.bf16 %v1477, %v1474
          %v1601 = vpack.c.bf16 %v1485, %v1482
          %v1602 = vpack.c.bf16 %v1493, %v1490
          %v1603 = vpack.c.bf16 %v1501, %v1498
          %v1604 = vpack.c.bf16 %v1509, %v1506
          %v1605 = vpack.c.bf16 %v1517, %v1514
          %v1606 = vpack.c.bf16 %v1525, %v1522
          %v1607 = vpack.c.bf16 %v1533, %v1530
          %v1608 = vpack.c.bf16 %v1541, %v1538
          %v1609 = vpack.c.bf16 %v1549, %v1546
          %v1610 = vpack.c.bf16 %v1557, %v1554
          %v1611 = vpack.c.bf16 %v1565, %v1562
          %v1612 = vpack.c.bf16 %v1573, %v1570
          %v1613 = vpack.c.bf16 %v1581, %v1578
          %v1614 = vpack.c.bf16 %v1589, %v1586
          %v1615 = vpack.c.bf16 %v1597, %v1594
          %v1632 = vunpack.c.l.b16 %v1600
          %v1633 = vunpack.c.h.b16 %v1600
          %v1634 = vunpack.c.l.b16 %v1601
          %v1635 = vunpack.c.h.b16 %v1601
          %v1636 = vunpack.c.l.b16 %v1602
          %v1637 = vunpack.c.h.b16 %v1602
          %v1638 = vunpack.c.l.b16 %v1603
          %v1639 = vunpack.c.h.b16 %v1603
          %v1640 = vunpack.c.l.b16 %v1604
          %v1641 = vunpack.c.h.b16 %v1604
          %v1642 = vunpack.c.l.b16 %v1605
          %v1643 = vunpack.c.h.b16 %v1605
          %v1644 = vunpack.c.l.b16 %v1606
          %v1645 = vunpack.c.h.b16 %v1606
          %v1646 = vunpack.c.l.b16 %v1607
          %v1647 = vunpack.c.h.b16 %v1607
          %v1648 = vunpack.c.l.b16 %v1608
          %v1649 = vunpack.c.h.b16 %v1608
          %v1650 = vunpack.c.l.b16 %v1609
          %v1651 = vunpack.c.h.b16 %v1609
          %v1652 = vunpack.c.l.b16 %v1610
          %v1653 = vunpack.c.h.b16 %v1610
          %v1654 = vunpack.c.l.b16 %v1611
          %v1655 = vunpack.c.h.b16 %v1611
          %v1656 = vunpack.c.l.b16 %v1612
          %v1657 = vunpack.c.h.b16 %v1612
          %v1658 = vunpack.c.l.b16 %v1613
          %v1659 = vunpack.c.h.b16 %v1613
          %v1660 = vunpack.c.l.b16 %v1614
          %v1661 = vunpack.c.h.b16 %v1614
          %v1662 = vunpack.c.l.b16 %v1615
          %v1663 = vunpack.c.h.b16 %v1615
          %v1664 = vpack.c.b16 %v1632, %v1632
          %v1665 = vpack.c.b16 %v1633, %v1633
          %v1666 = vpack.c.b16 %v1634, %v1634
          %v1667 = vpack.c.b16 %v1635, %v1635
          %v1668 = vpack.c.b16 %v1636, %v1636
          %v1669 = vpack.c.b16 %v1637, %v1637
          %v1670 = vpack.c.b16 %v1638, %v1638
          %v1671 = vpack.c.b16 %v1639, %v1639
          %v1672 = vpack.c.b16 %v1640, %v1640
          %v1673 = vpack.c.b16 %v1641, %v1641
          %v1674 = vpack.c.b16 %v1642, %v1642
          %v1675 = vpack.c.b16 %v1643, %v1643
          %v1676 = vpack.c.b16 %v1644, %v1644
          %v1677 = vpack.c.b16 %v1645, %v1645
          %v1678 = vpack.c.b16 %v1646, %v1646
          %v1679 = vpack.c.b16 %v1647, %v1647
          %v1680 = vpack.c.b16 %v1648, %v1648
          %v1681 = vpack.c.b16 %v1649, %v1649
          %v1682 = vpack.c.b16 %v1650, %v1650
          %v1683 = vpack.c.b16 %v1651, %v1651
          %v1684 = vpack.c.b16 %v1652, %v1652
          %v1685 = vpack.c.b16 %v1653, %v1653
          %v1686 = vpack.c.b16 %v1654, %v1654
          %v1687 = vpack.c.b16 %v1655, %v1655
          %v1688 = vpack.c.b16 %v1656, %v1656
          %v1689 = vpack.c.b16 %v1657, %v1657
          %v1690 = vpack.c.b16 %v1658, %v1658
          %v1691 = vpack.c.b16 %v1659, %v1659
          %v1692 = vpack.c.b16 %v1660, %v1660
          %v1693 = vpack.c.b16 %v1661, %v1661
          %v1694 = vpack.c.b16 %v1662, %v1662
          %v1695 = vpack.c.b16 %v1663, %v1663
          %1728 = vst [vmem:[%s348] sm:$0xf] %v1664
          %1729 = vst [vmem:[%s348 + $0x4] sm:$0xf] %v1665
          %1730 = vst [vmem:[%s348 + $0x8] sm:$0xf] %v1666
          %1731 = vst [vmem:[%s348 + $0xc] sm:$0xf] %v1667
          %1732 = vst [vmem:[%s348 + $0x10] sm:$0xf] %v1668
          %1733 = vst [vmem:[%s348 + $0x14] sm:$0xf] %v1669
          %1734 = vst [vmem:[%s348 + $0x18] sm:$0xf] %v1670
          %1735 = vst [vmem:[%s348 + $0x1c] sm:$0xf] %v1671
          %1736 = vst [vmem:[%s348 + $0x20] sm:$0xf] %v1672
          %1737 = vst [vmem:[%s348 + $0x24] sm:$0xf] %v1673
          %1738 = vst [vmem:[%s348 + $0x28] sm:$0xf] %v1674
          %1739 = vst [vmem:[%s348 + $0x2c] sm:$0xf] %v1675
          %1740 = vst [vmem:[%s348 + $0x30] sm:$0xf] %v1676
          %1741 = vst [vmem:[%s348 + $0x34] sm:$0xf] %v1677
          %1742 = vst [vmem:[%s348 + $0x38] sm:$0xf] %v1678
          %1743 = vst [vmem:[%s348 + $0x3c] sm:$0xf] %v1679
          %1744 = vst [vmem:[%s348 + $0x40] sm:$0xf] %v1680
          %1745 = vst [vmem:[%s348 + $0x44] sm:$0xf] %v1681
          %1746 = vst [vmem:[%s348 + $0x48] sm:$0xf] %v1682
          %1747 = vst [vmem:[%s348 + $0x4c] sm:$0xf] %v1683
          %1748 = vst [vmem:[%s348 + $0x50] sm:$0xf] %v1684
          %1749 = vst [vmem:[%s348 + $0x54] sm:$0xf] %v1685
          %1750 = vst [vmem:[%s348 + $0x58] sm:$0xf] %v1686
          %1751 = vst [vmem:[%s348 + $0x5c] sm:$0xf] %v1687
          %1752 = vst [vmem:[%s348 + $0x60] sm:$0xf] %v1688
          %1753 = vst [vmem:[%s348 + $0x64] sm:$0xf] %v1689
          %1754 = vst [vmem:[%s348 + $0x68] sm:$0xf] %v1690
          %1755 = vst [vmem:[%s348 + $0x6c] sm:$0xf] %v1691
          %1756 = vst [vmem:[%s348 + $0x70] sm:$0xf] %v1692
          %1757 = vst [vmem:[%s348 + $0x74] sm:$0xf] %v1693
          %1758 = vst [vmem:[%s348 + $0x78] sm:$0xf] %v1694
          %1759 = vst [vmem:[%s348 + $0x7c] sm:$0xf] %v1695
        $region68: #{tpu_custom_call.1} parent=39 // pred_fallthru
          _
        %s1760 = sand.u32 %s185, 1
        %s1761 = scalar_lea.sflag [#allocation8], %s1760
        %s1762 = sand.u32 %s185, 1
        %s1763 = smul.addr %s1762, 128
        %s1764 = scalar_lea.vmem [#allocation14], %s1763
        // Predicated region
        $region69: #{tpu_custom_call.1} parent=39 // pred_check
          %p1765 = pneg %p195
        $region70: #{tpu_custom_call.1} parent=39 // pred_check_branch
          %1767 = sbr.rel (%p1765) target = $region72
        $region71: #{tpu_custom_call.1} parent=39 // pred_region
          %s1768 = smul.u32 32, %s36
          %s1770 = ssub.s32 2048, 2048
          %1771 = vsyncadd %s1761, %s1770
          %s1772 = smul.addr %s1768, 64
          %s1773 = scalar_lea.hbm %s7, %s1772
          %s1774 = sshll.u32 %s1764, 4
          %s1775 = int_to_ptr.vmem [resolvable:$true] %s1774
          %1780 = dma.vmem_to_hbm [thread:$0]  %s1775, 2048, %s1773, %s1761, 64, 64, 4
        $region72: #{tpu_custom_call.1} parent=39 // pred_fallthru
          _
      $region40: #{tpu_custom_call.1} parent=5 // pred_fallthru
        _
      %p1781 = scmp.le.s32.totalorder 2, %s27
      // Predicated region
      $region73: #{tpu_custom_call.1} parent=5 // pred_check
        %p1782 = pneg %p1781
      $region74: #{tpu_custom_call.1} parent=5 // pred_check_branch
        %1784 = sbr.rel (%p1782) target = $region76
      $region75: #{tpu_custom_call.1} parent=5 // pred_region
        %s1785 = ssub.s32 %s27, 2
        // Predicated region
        $region77: #{tpu_custom_call.1} parent=75 // pred_check
          %p1786 = pneg %p201
        $region78: #{tpu_custom_call.1} parent=75 // pred_check_branch
          %1788 = sbr.rel (%p1786) target = $region80
        $region79: #{tpu_custom_call.1} parent=75 // pred_region
          %s1789 = sand.u32 %s186, 1
          %s1790 = scalar_lea.sflag [#allocation8], %s1789
          %s1791 = sand.u32 %s186, 1
          %s1792 = smul.addr %s1791, 128
          %s1793 = scalar_lea.vmem [#allocation14], %s1792
          %1794 = dma.done %s1790, 2048
        $region80: #{tpu_custom_call.1} parent=75 // pred_fallthru
          _
      $region76: #{tpu_custom_call.1} parent=5 // pred_fallthru
        _
    $region6: #{tpu_custom_call.1} parent=1 // loop_footer
      %s31 = sadd.s32 1, %s27
    $region7: #{tpu_custom_call.1} parent=1 // loop_footer_branch
      %26 = sbr.rel target = $region3
    $region8: #{tpu_custom_call.1} parent=1 // loop_exit
      _
    %1795 = vsyncpa [#allocation7], 1
    %s1796 = scalar_lea.sflag [#allocation7], 1
    %1797 = vsyncpa %s1796, 1
    %1798 = vsyncpa [#allocation10], 1
    %1799 = vsyncpa [#allocation13], 1
    %1800 = vsyncpa [#allocation8], 1
    %s1801 = scalar_lea.sflag [#allocation8], 1
    %1802 = vsyncpa %s1801, 1

</llo_original>
